<compile_context>
chip_gen: v5e
topology: v5e:2x2
jax: 0.10.0
libtpu: 0.0.40
codegen_flags: <defaults>
</compile_context>

<pallas_src>
import math
from functools import partial

import numpy as np
import jax
import jax.numpy as jnp
from jax.experimental import pallas as pl
from jax.experimental.pallas import tpu as pltpu


NUM_CLASSES = 4    # including background class 0
NUM_ANCHORS = 3    # anchors per feature-map location (aspect ratios 1, 2, 0.5)


# ----------------------------- Pallas kernels -------------------------------

def _mm_kernel(a_ref, w_ref, b_ref, o_ref, *, relu6, sigmoid_cols):
    """A @ W + b with optional ReLU6 or column-masked sigmoid epilogue."""
    acc = jnp.dot(a_ref[...], w_ref[...], preferred_element_type=jnp.float32)
    acc = acc + b_ref[...]
    if relu6:
        acc = jnp.clip(acc, 0.0, 6.0)
    if sigmoid_cols is not None:
        col = jax.lax.broadcasted_iota(jnp.int32, acc.shape, 1)
        acc = jnp.where(col < sigmoid_cols, jax.nn.sigmoid(acc), acc)
    o_ref[...] = acc.astype(o_ref.dtype)


def matmul_fused(a, w, b, *, relu6=False, sigmoid_cols=None,
                 out_dtype=jnp.float32):
    """a: (M, K) bf16, w: (K, N) bf16, b: (N,) f32 -> (M, N) out_dtype.

    Full-array single-block call for small M (no HBM padding copies); tiles
    over M with a parallel grid axis when M is large enough to matter.
    """
    M, K = a.shape
    N = w.shape[1]
    b2 = b.reshape(1, N).astype(jnp.float32)
    kern = partial(_mm_kernel, relu6=relu6, sigmoid_cols=sigmoid_cols)

    tm = None
    for cand in (512, 256, 128):
        if M >= 2 * cand and M % cand == 0:
            tm = cand
            break

    if tm is None:
        return pl.pallas_call(
            kern,
            out_shape=jax.ShapeDtypeStruct((M, N), out_dtype),
            grid=(1,),
            in_specs=[
                pl.BlockSpec((M, K), lambda i: (0, 0)),
                pl.BlockSpec((K, N), lambda i: (0, 0)),
                pl.BlockSpec((1, N), lambda i: (0, 0)),
            ],
            out_specs=pl.BlockSpec((M, N), lambda i: (0, 0)),
        )(a, w, b2)

    return pl.pallas_call(
        kern,
        out_shape=jax.ShapeDtypeStruct((M, N), out_dtype),
        grid=(M // tm,),
        in_specs=[
            pl.BlockSpec((tm, K), lambda i: (i, 0)),
            pl.BlockSpec((K, N), lambda i: (0, 0)),
            pl.BlockSpec((1, N), lambda i: (0, 0)),
        ],
        out_specs=pl.BlockSpec((tm, N), lambda i: (i, 0)),
        compiler_params=pltpu.CompilerParams(
            dimension_semantics=("parallel",)),
    )(a, w, b2)


def _decode_kernel(rel_ref, anc_ref, o_ref):
    """rel: (4, M) = (ty, tx, th, tw); anc: (4, M) = (yc_a, xc_a, ha, wa)."""
    # coder_weights = (10, 10, 5, 5) baked as reciprocal multiplies.
    ty = rel_ref[0:1, :] * 0.1
    tx = rel_ref[1:2, :] * 0.1
    th = rel_ref[2:3, :] * 0.2
    tw = rel_ref[3:4, :] * 0.2

    yc_a = anc_ref[0:1, :]
    xc_a = anc_ref[1:2, :]
    ha = anc_ref[2:3, :]
    wa = anc_ref[3:4, :]

    h_half = jnp.exp(th) * ha * 0.5
    w_half = jnp.exp(tw) * wa * 0.5
    yc = ty * ha + yc_a
    xc = tx * wa + xc_a

    o_ref[...] = jnp.concatenate(
        [yc - h_half, xc - w_half, yc + h_half, xc + w_half], axis=0)


def decode_boxes_pallas(box_regression, anchors_cwh):
    """box_regression: (N, P, 4) f32; anchors_cwh: (4, P) constant -> (N, P, 4)."""
    N, P, _ = box_regression.shape
    M = N * P
    rel = box_regression.reshape(M, 4).T            # (4, M)
    anc = jnp.tile(anchors_cwh, (1, N))             # (4, M), constant-folded
    out = pl.pallas_call(
        _decode_kernel,
        out_shape=jax.ShapeDtypeStruct((4, M), jnp.float32),
        grid=(1,),
        in_specs=[
            pl.BlockSpec((4, M), lambda i: (0, 0)),
            pl.BlockSpec((4, M), lambda i: (0, 0)),
        ],
        out_specs=pl.BlockSpec((4, M), lambda i: (0, 0)),
    )(rel, anc)
    return out.T.reshape(N, P, 4)


# --------------------------- conv / head wrappers ----------------------------

def conv2d_nhwc(x, wm_b, ksize, stride, pad, *, relu6=True,
                out_dtype=jnp.bfloat16):
    """NHWC conv with PyTorch semantics.  wm: (kh*kw*Cin, Cout) bf16 prepacked."""
    wm, b = wm_b
    kh = kw = ksize
    N, H, W, Cin = x.shape
    Cout = wm.shape[1]
    if kh == 1 and kw == 1 and stride == 1 and pad == 0:
        a = x.reshape(N * H * W, Cin)
        Ho, Wo = H, W
    else:
        xp = jnp.pad(x, ((0, 0), (pad, pad), (pad, pad), (0, 0)))
        Ho = (H + 2 * pad - kh) // stride + 1
        Wo = (W + 2 * pad - kw) // stride + 1
        patches = [
            xp[:, i:i + stride * Ho:stride, j:j + stride * Wo:stride, :]
            for i in range(kh) for j in range(kw)
        ]
        a = jnp.concatenate(patches, axis=-1).reshape(N * Ho * Wo, kh * kw * Cin)
    out = matmul_fused(a, wm, b, relu6=relu6, out_dtype=out_dtype)
    return out.reshape(N, Ho, Wo, Cout)


def head_fused(fm, wm_b):
    """Fused cls+box 1x1 heads with in-kernel sigmoid on the class columns."""
    wm, bm = wm_b
    N, H, W, C = fm.shape
    n_cls = NUM_ANCHORS * NUM_CLASSES
    a = fm.reshape(N * H * W, C)
    out = matmul_fused(a, wm, bm, relu6=False, sigmoid_cols=n_cls,
                       out_dtype=jnp.float32)
    out = out.reshape(N, H * W, n_cls + NUM_ANCHORS * 4)
    scores = out[:, :, :n_cls].reshape(N, H * W * NUM_ANCHORS, NUM_CLASSES)
    boxreg = out[:, :, n_cls:].reshape(N, H * W * NUM_ANCHORS, 4)
    return scores, boxreg


# ------------------------------ model definition ----------------------------

def init_params(key):
    keys = jax.random.split(key, 32)

    def conv_p(k, cout, cin, kh, kw):
        w = jax.random.normal(k, (cout, cin, kh, kw), jnp.float32) * 0.1
        b = jnp.zeros((cout,), jnp.float32)
        return (w, b)

    p = {}
    # backbone (MobileNet-like, tiny)
    p["bb1"] = conv_p(keys[0], 8, 3, 3, 3)     # 3x3 s2
    p["bb2"] = conv_p(keys[1], 16, 8, 1, 1)    # 1x1
    p["bb3"] = conv_p(keys[2], 16, 16, 3, 3)   # 3x3 s2
    # extras (each: 1x1 reduce + 3x3 s2)
    p["ex1a"] = conv_p(keys[3], 8, 16, 1, 1)
    p["ex1b"] = conv_p(keys[4], 16, 8, 3, 3)
    p["ex2a"] = conv_p(keys[5], 8, 16, 1, 1)
    p["ex2b"] = conv_p(keys[6], 16, 8, 3, 3)
    # prediction heads (1x1 class / box convs per feature map)
    feat_channels = [16, 16, 16, 16]
    for i, c in enumerate(feat_channels):
        p[f"cls{i}"] = conv_p(keys[7 + 2 * i], NUM_ANCHORS * NUM_CLASSES, c, 1, 1)
        p[f"box{i}"] = conv_p(keys[8 + 2 * i], NUM_ANCHORS * 4, c, 1, 1)
    return p


def prepack_params(p):
    """One-time (outside jit) repack: matmul-ready bf16 weights, fused heads."""
    def pack(wb):
        w, b = wb
        cout, cin, kh, kw = w.shape
        wm = jnp.transpose(w, (2, 3, 1, 0)).reshape(kh * kw * cin, cout)
        return wm.astype(jnp.bfloat16), jnp.asarray(b, jnp.float32)

    q = {}
    for name in ("bb1", "bb2", "bb3", "ex1a", "ex1b", "ex2a", "ex2b"):
        q[name] = pack(p[name])
    for i in range(4):
        cw, cb = p[f"cls{i}"]
        bw, bb = p[f"box{i}"]
        c = cw.shape[1]
        wm = jnp.concatenate(
            [cw.reshape(-1, c).T, bw.reshape(-1, c).T], axis=1).astype(jnp.bfloat16)
        bm = jnp.concatenate([cb, bb], axis=0).astype(jnp.float32)
        q[f"head{i}"] = (wm, bm)
    return q


def generate_anchors_cwh(shapes, min_scale=0.2, max_scale=0.95):
    """Center-form (yc, xc, h, w) anchors, location-major / anchor-minor.

    Runs once at trace time (static shapes) -> graph constant."""
    aspect_ratios = [1.0, 2.0, 0.5][:NUM_ANCHORS]
    K = len(shapes)
    anchors = []
    for k, (H, W) in enumerate(shapes):
        scale = min_scale + (max_scale - min_scale) * k / max(K - 1, 1)
        for y in range(H):
            for x in range(W):
                cy = (y + 0.5) / H
                cx = (x + 0.5) / W
                for ar in aspect_ratios:
                    h = scale / math.sqrt(ar)
                    w = scale * math.sqrt(ar)
                    anchors.append([cy, cx, h, w])
    return np.asarray(anchors, dtype=np.float32).T   # (4, P)


def ssd_model(x_nchw, q):
    # single layout change at the module boundary; bf16 activations throughout
    x = jnp.transpose(x_nchw, (0, 2, 3, 1)).astype(jnp.bfloat16)

    # backbone -> list of feature maps (NHWC)
    f = conv2d_nhwc(x, q["bb1"], ksize=3, stride=2, pad=1, relu6=True)
    f = conv2d_nhwc(f, q["bb2"], ksize=1, stride=1, pad=0, relu6=True)
    fm1 = f
    fm2 = conv2d_nhwc(fm1, q["bb3"], ksize=3, stride=2, pad=1, relu6=True)
    feature_maps = [fm1, fm2]

    # extras: each module consumes the previous output and appends a new map
    out = feature_maps[-1]
    for ex in ("ex1", "ex2"):
        out = conv2d_nhwc(out, q[ex + "a"], ksize=1, stride=1, pad=0, relu6=True)
        out = conv2d_nhwc(out, q[ex + "b"], ksize=3, stride=2, pad=1, relu6=True)
        feature_maps.append(out)

    # fused predictors (cls + box in one kernel, sigmoid applied in-kernel)
    cls_list, box_list = [], []
    for k, fm in enumerate(feature_maps):
        sc, bx = head_fused(fm, q[f"head{k}"])
        cls_list.append(sc)
        box_list.append(bx)

    scores = jnp.concatenate(cls_list, axis=1)          # (N, P, num_classes)
    box_regression = jnp.concatenate(box_list, axis=1)  # (N, P, 4)

    shapes = [fm.shape[1:3] for fm in feature_maps]     # static Python ints
    anchors = jnp.asarray(generate_anchors_cwh(shapes)) # trace-time constant
    boxes = decode_boxes_pallas(box_regression, anchors)
    return scores, boxes


ssd_model_jit = jax.jit(ssd_model)


# ------------------------ host-side post-processing --------------------------
# TODO(synk): per-class score filtering + NMS is data-dependent (dynamic shapes)
#             and has no clean Pallas equivalent; it is done on host in numpy.

def _iou_np(boxes, box):
    ymin = np.maximum(boxes[:, 0], box[0])
    xmin = np.maximum(boxes[:, 1], box[1])
    ymax = np.minimum(boxes[:, 2], box[2])
    xmax = np.minimum(boxes[:, 3], box[3])
    inter = np.clip(ymax - ymin, 0, None) * np.clip(xmax - xmin, 0, None)
    area1 = (boxes[:, 2] - boxes[:, 0]) * (boxes[:, 3] - boxes[:, 1])
    area2 = (box[2] - box[0]) * (box[3] - box[1])
    return inter / np.maximum(area1 + area2 - inter, 1e-9)


def _hard_nms(box_probs, iou_threshold, candidate_size=200):
    scores = box_probs[:, -1]
    order = np.argsort(-scores)[:candidate_size]
    picked = []
    while order.size > 0:
        cur = order[0]
        picked.append(int(cur))
        if order.size == 1:
            break
        cur_box = box_probs[cur, :4]
        order = order[1:]
        ious = _iou_np(box_probs[order, :4], cur_box)
        order = order[ious <= iou_threshold]
    return box_probs[picked, :]


def filter_results(scores, boxes, score_threshold=0.3, nms_threshold=0.6):
    selected, labels = [], []
    for ci in range(1, scores.shape[1]):
        probs = scores[:, ci]
        mask = probs > score_threshold
        probs_m = probs[mask]
        boxes_m = boxes[mask, :]
        box_probs = np.concatenate([boxes_m, probs_m.reshape(-1, 1)], axis=1)
        box_probs = _hard_nms(box_probs, nms_threshold)
        selected.append(box_probs)
        labels.append(np.full((box_probs.shape[0],), ci, dtype=np.int64))
    sel = np.concatenate(selected, axis=0)
    lab = np.concatenate(labels, axis=0)
    return sel[:, :4], lab, sel[:, 4]


def ssd_forward(images, q):
    scores, boxes = ssd_model_jit(images, q)
    jax.block_until_ready((scores, boxes))
    scores_np = np.asarray(jax.device_get(scores), dtype=np.float32)
    boxes_np = np.asarray(jax.device_get(boxes), dtype=np.float32)
    list_boxes, list_labels, list_scores = [], [], []
    for b in range(scores_np.shape[0]):
        bboxes, blabels, bscores = filter_results(scores_np[b], boxes_np[b])
        list_boxes.append(bboxes)
        list_labels.append(blabels)
        list_scores.append(bscores)
    return [list_boxes, list_labels, list_scores]


# ----------------------------------- main ------------------------------------

if __name__ == "__main__":
    key = jax.random.PRNGKey(0)
    pkey, xkey = jax.random.split(key)
    params = init_params(pkey)
    q = prepack_params(params)

    # small input consistent with SSD convention (N, C=3, H, W)
    x = jax.random.normal(xkey, (2, 3, 16, 16), jnp.float32)

    out = ssd_forward(x, q)
    list_boxes, list_labels, list_scores = out

    # basic sanity on shapes/dtypes
    assert len(list_boxes) == 2
    assert list_boxes[0].shape[1] == 4
    assert list_labels[0].dtype == np.int64
    assert list_scores[0].ndim == 1

    print("KERNEL_OK")
</pallas_src>

<mosaic_0001>
module attributes {stable_mosaic.version = 11 : i64} {
  func.func @_mm_kernel(%arg0: i32, %arg1: memref<128x27xbf16, #tpu.memory_space<vmem>>, %arg2: memref<27x8xbf16, #tpu.memory_space<vmem>>, %arg3: memref<1x8xf32, #tpu.memory_space<vmem>>, %arg4: memref<128x8xbf16, #tpu.memory_space<vmem>>) attributes {dimension_semantics = [#tpu.dimension_semantics<arbitrary>], iteration_bounds = array<i64: 1>, scalar_prefetch = 0 : i64, scratch_operands = 0 : i64, tpu.core_type = #tpu.core_type<tc>, window_params = [{pipeline_mode = #tpu.pipeline_mode<synchronous>, transform_indices = @transform_0, window_bounds = array<i64: 128, 27>}, {pipeline_mode = #tpu.pipeline_mode<synchronous>, transform_indices = @transform_1, window_bounds = array<i64: 27, 8>}, {pipeline_mode = #tpu.pipeline_mode<synchronous>, transform_indices = @transform_2, window_bounds = array<i64: 1, 8>}, {pipeline_mode = #tpu.pipeline_mode<synchronous>, transform_indices = @transform_3, window_bounds = array<i64: 128, 8>}]} {
    %c0 = arith.constant 0 : index
    %c0_0 = arith.constant 0 : index
    %0 = vector.load %arg1[%c0, %c0_0] : memref<128x27xbf16, #tpu.memory_space<vmem>>, vector<128x27xbf16>
    %c0_1 = arith.constant 0 : index
    %c0_2 = arith.constant 0 : index
    %1 = vector.load %arg2[%c0_1, %c0_2] : memref<27x8xbf16, #tpu.memory_space<vmem>>, vector<27x8xbf16>
    %cst = arith.constant dense<0.000000e+00> : vector<128x8xf32>
    %2 = tpu.matmul %0, %1, %cst {dimension_numbers = #tpu.dot_dimension_numbers<[1], [0], [0], [1], [0, 0, 1, 1], [], []>} : vector<128x27xbf16>, vector<27x8xbf16>, vector<128x8xf32> -> vector<128x8xf32>
    %c0_3 = arith.constant 0 : index
    %c0_4 = arith.constant 0 : index
    %3 = vector.load %arg3[%c0_3, %c0_4] : memref<1x8xf32, #tpu.memory_space<vmem>>, vector<1x8xf32>
    %4 = vector.broadcast %3 : vector<1x8xf32> to vector<128x8xf32>
    %5 = arith.addf %2, %4 : vector<128x8xf32>
    %cst_5 = arith.constant 0.000000e+00 : f32
    %cst_6 = arith.constant 6.000000e+00 : f32
    %6 = vector.broadcast %cst_5 : f32 to vector<128x8xf32>
    %7 = arith.maximumf %6, %5 : vector<128x8xf32>
    %8 = vector.broadcast %cst_6 : f32 to vector<128x8xf32>
    %9 = arith.minimumf %8, %7 : vector<128x8xf32>
    %10 = arith.truncf %9 : vector<128x8xf32> to vector<128x8xbf16>
    %c0_7 = arith.constant 0 : index
    %c0_8 = arith.constant 0 : index
    %11 = vector.load %arg4[%c0_7, %c0_8] : memref<128x8xbf16, #tpu.memory_space<vmem>>, vector<128x8xbf16>
    tpu.vector_store %arg4[%c0_7, %c0_8], %10 {strides = array<i32>} : memref<128x8xbf16, #tpu.memory_space<vmem>>, vector<128x8xbf16>,
    return
  }
  func.func @transform_0(%arg0: i32) -> (i32, i32) {
    %c0_i32 = arith.constant 0 : i32
    %c0_i32_0 = arith.constant 0 : i32
    %c0_i32_1 = arith.constant 0 : i32
    return %c0_i32, %c0_i32_0 : i32, i32
  }
  func.func @transform_1(%arg0: i32) -> (i32, i32) {
    %c0_i32 = arith.constant 0 : i32
    %c0_i32_0 = arith.constant 0 : i32
    %c0_i32_1 = arith.constant 0 : i32
    return %c0_i32, %c0_i32_0 : i32, i32
  }
  func.func @transform_2(%arg0: i32) -> (i32, i32) {
    %c0_i32 = arith.constant 0 : i32
    %c0_i32_0 = arith.constant 0 : i32
    %c0_i32_1 = arith.constant 0 : i32
    return %c0_i32, %c0_i32_0 : i32, i32
  }
  func.func @transform_3(%arg0: i32) -> (i32, i32) {
    %c0_i32 = arith.constant 0 : i32
    %c0_i32_0 = arith.constant 0 : i32
    %c0_i32_1 = arith.constant 0 : i32
    return %c0_i32, %c0_i32_0 : i32, i32
  }
}

module attributes {stable_mosaic.version = 11 : i64} {
  func.func @_mm_kernel(%arg0: i32, %arg1: memref<128x8xbf16, #tpu.memory_space<vmem>>, %arg2: memref<8x16xbf16, #tpu.memory_space<vmem>>, %arg3: memref<1x16xf32, #tpu.memory_space<vmem>>, %arg4: memref<128x16xbf16, #tpu.memory_space<vmem>>) attributes {dimension_semantics = [#tpu.dimension_semantics<arbitrary>], iteration_bounds = array<i64: 1>, scalar_prefetch = 0 : i64, scratch_operands = 0 : i64, tpu.core_type = #tpu.core_type<tc>, window_params = [{pipeline_mode = #tpu.pipeline_mode<synchronous>, transform_indices = @transform_0, window_bounds = array<i64: 128, 8>}, {pipeline_mode = #tpu.pipeline_mode<synchronous>, transform_indices = @transform_1, window_bounds = array<i64: 8, 16>}, {pipeline_mode = #tpu.pipeline_mode<synchronous>, transform_indices = @transform_2, window_bounds = array<i64: 1, 16>}, {pipeline_mode = #tpu.pipeline_mode<synchronous>, transform_indices = @transform_3, window_bounds = array<i64: 128, 16>}]} {
    %c0 = arith.constant 0 : index
    %c0_0 = arith.constant 0 : index
    %0 = vector.load %arg1[%c0, %c0_0] : memref<128x8xbf16, #tpu.memory_space<vmem>>, vector<128x8xbf16>
    %c0_1 = arith.constant 0 : index
    %c0_2 = arith.constant 0 : index
    %1 = vector.load %arg2[%c0_1, %c0_2] : memref<8x16xbf16, #tpu.memory_space<vmem>>, vector<8x16xbf16>
    %cst = arith.constant dense<0.000000e+00> : vector<128x16xf32>
    %2 = tpu.matmul %0, %1, %cst {dimension_numbers = #tpu.dot_dimension_numbers<[1], [0], [0], [1], [0, 0, 1, 1], [], []>} : vector<128x8xbf16>, vector<8x16xbf16>, vector<128x16xf32> -> vector<128x16xf32>
    %c0_3 = arith.constant 0 : index
    %c0_4 = arith.constant 0 : index
    %3 = vector.load %arg3[%c0_3, %c0_4] : memref<1x16xf32, #tpu.memory_space<vmem>>, vector<1x16xf32>
    %4 = vector.broadcast %3 : vector<1x16xf32> to vector<128x16xf32>
    %5 = arith.addf %2, %4 : vector<128x16xf32>
    %cst_5 = arith.constant 0.000000e+00 : f32
    %cst_6 = arith.constant 6.000000e+00 : f32
    %6 = vector.broadcast %cst_5 : f32 to vector<128x16xf32>
    %7 = arith.maximumf %6, %5 : vector<128x16xf32>
    %8 = vector.broadcast %cst_6 : f32 to vector<128x16xf32>
    %9 = arith.minimumf %8, %7 : vector<128x16xf32>
    %10 = arith.truncf %9 : vector<128x16xf32> to vector<128x16xbf16>
    %c0_7 = arith.constant 0 : index
    %c0_8 = arith.constant 0 : index
    %11 = vector.load %arg4[%c0_7, %c0_8] : memref<128x16xbf16, #tpu.memory_space<vmem>>, vector<128x16xbf16>
    tpu.vector_store %arg4[%c0_7, %c0_8], %10 {strides = array<i32>} : memref<128x16xbf16, #tpu.memory_space<vmem>>, vector<128x16xbf16>,
    return
  }
  func.func @transform_0(%arg0: i32) -> (i32, i32) {
    %c0_i32 = arith.constant 0 : i32
    %c0_i32_0 = arith.constant 0 : i32
    %c0_i32_1 = arith.constant 0 : i32
    return %c0_i32, %c0_i32_0 : i32, i32
  }
  func.func @transform_1(%arg0: i32) -> (i32, i32) {
    %c0_i32 = arith.constant 0 : i32
    %c0_i32_0 = arith.constant 0 : i32
    %c0_i32_1 = arith.constant 0 : i32
    return %c0_i32, %c0_i32_0 : i32, i32
  }
  func.func @transform_2(%arg0: i32) -> (i32, i32) {
    %c0_i32 = arith.constant 0 : i32
    %c0_i32_0 = arith.constant 0 : i32
    %c0_i32_1 = arith.constant 0 : i32
    return %c0_i32, %c0_i32_0 : i32, i32
  }
  func.func @transform_3(%arg0: i32) -> (i32, i32) {
    %c0_i32 = arith.constant 0 : i32
    %c0_i32_0 = arith.constant 0 : i32
    %c0_i32_1 = arith.constant 0 : i32
    return %c0_i32, %c0_i32_0 : i32, i32
  }
}

module attributes {stable_mosaic.version = 11 : i64} {
  func.func @_mm_kernel(%arg0: i32, %arg1: memref<32x16xbf16, #tpu.memory_space<vmem>>, %arg2: memref<16x8xbf16, #tpu.memory_space<vmem>>, %arg3: memref<1x8xf32, #tpu.memory_space<vmem>>, %arg4: memref<32x8xbf16, #tpu.memory_space<vmem>>) attributes {dimension_semantics = [#tpu.dimension_semantics<arbitrary>], iteration_bounds = array<i64: 1>, scalar_prefetch = 0 : i64, scratch_operands = 0 : i64, tpu.core_type = #tpu.core_type<tc>, window_params = [{pipeline_mode = #tpu.pipeline_mode<synchronous>, transform_indices = @transform_0, window_bounds = array<i64: 32, 16>}, {pipeline_mode = #tpu.pipeline_mode<synchronous>, transform_indices = @transform_1, window_bounds = array<i64: 16, 8>}, {pipeline_mode = #tpu.pipeline_mode<synchronous>, transform_indices = @transform_2, window_bounds = array<i64: 1, 8>}, {pipeline_mode = #tpu.pipeline_mode<synchronous>, transform_indices = @transform_3, window_bounds = array<i64: 32, 8>}]} {
    %c0 = arith.constant 0 : index
    %c0_0 = arith.constant 0 : index
    %0 = vector.load %arg1[%c0, %c0_0] : memref<32x16xbf16, #tpu.memory_space<vmem>>, vector<32x16xbf16>
    %c0_1 = arith.constant 0 : index
    %c0_2 = arith.constant 0 : index
    %1 = vector.load %arg2[%c0_1, %c0_2] : memref<16x8xbf16, #tpu.memory_space<vmem>>, vector<16x8xbf16>
    %cst = arith.constant dense<0.000000e+00> : vector<32x8xf32>
    %2 = tpu.matmul %0, %1, %cst {dimension_numbers = #tpu.dot_dimension_numbers<[1], [0], [0], [1], [0, 0, 1, 1], [], []>} : vector<32x16xbf16>, vector<16x8xbf16>, vector<32x8xf32> -> vector<32x8xf32>
    %c0_3 = arith.constant 0 : index
    %c0_4 = arith.constant 0 : index
    %3 = vector.load %arg3[%c0_3, %c0_4] : memref<1x8xf32, #tpu.memory_space<vmem>>, vector<1x8xf32>
    %4 = vector.broadcast %3 : vector<1x8xf32> to vector<32x8xf32>
    %5 = arith.addf %2, %4 : vector<32x8xf32>
    %cst_5 = arith.constant 0.000000e+00 : f32
    %cst_6 = arith.constant 6.000000e+00 : f32
    %6 = vector.broadcast %cst_5 : f32 to vector<32x8xf32>
    %7 = arith.maximumf %6, %5 : vector<32x8xf32>
    %8 = vector.broadcast %cst_6 : f32 to vector<32x8xf32>
    %9 = arith.minimumf %8, %7 : vector<32x8xf32>
    %10 = arith.truncf %9 : vector<32x8xf32> to vector<32x8xbf16>
    %c0_7 = arith.constant 0 : index
    %c0_8 = arith.constant 0 : index
    %11 = vector.load %arg4[%c0_7, %c0_8] : memref<32x8xbf16, #tpu.memory_space<vmem>>, vector<32x8xbf16>
    tpu.vector_store %arg4[%c0_7, %c0_8], %10 {strides = array<i32>} : memref<32x8xbf16, #tpu.memory_space<vmem>>, vector<32x8xbf16>,
    return
  }
  func.func @transform_0(%arg0: i32) -> (i32, i32) {
    %c0_i32 = arith.constant 0 : i32
    %c0_i32_0 = arith.constant 0 : i32
    %c0_i32_1 = arith.constant 0 : i32
    return %c0_i32, %c0_i32_0 : i32, i32
  }
  func.func @transform_1(%arg0: i32) -> (i32, i32) {
    %c0_i32 = arith.constant 0 : i32
    %c0_i32_0 = arith.constant 0 : i32
    %c0_i32_1 = arith.constant 0 : i32
    return %c0_i32, %c0_i32_0 : i32, i32
  }
  func.func @transform_2(%arg0: i32) -> (i32, i32) {
    %c0_i32 = arith.constant 0 : i32
    %c0_i32_0 = arith.constant 0 : i32
    %c0_i32_1 = arith.constant 0 : i32
    return %c0_i32, %c0_i32_0 : i32, i32
  }
  func.func @transform_3(%arg0: i32) -> (i32, i32) {
    %c0_i32 = arith.constant 0 : i32
    %c0_i32_0 = arith.constant 0 : i32
    %c0_i32_1 = arith.constant 0 : i32
    return %c0_i32, %c0_i32_0 : i32, i32
  }
}

module attributes {stable_mosaic.version = 11 : i64} {
  func.func @_mm_kernel(%arg0: i32, %arg1: memref<32x144xbf16, #tpu.memory_space<vmem>>, %arg2: memref<144x16xbf16, #tpu.memory_space<vmem>>, %arg3: memref<1x16xf32, #tpu.memory_space<vmem>>, %arg4: memref<32x16xbf16, #tpu.memory_space<vmem>>) attributes {dimension_semantics = [#tpu.dimension_semantics<arbitrary>], iteration_bounds = array<i64: 1>, scalar_prefetch = 0 : i64, scratch_operands = 0 : i64, tpu.core_type = #tpu.core_type<tc>, window_params = [{pipeline_mode = #tpu.pipeline_mode<synchronous>, transform_indices = @transform_0, window_bounds = array<i64: 32, 144>}, {pipeline_mode = #tpu.pipeline_mode<synchronous>, transform_indices = @transform_1, window_bounds = array<i64: 144, 16>}, {pipeline_mode = #tpu.pipeline_mode<synchronous>, transform_indices = @transform_2, window_bounds = array<i64: 1, 16>}, {pipeline_mode = #tpu.pipeline_mode<synchronous>, transform_indices = @transform_3, window_bounds = array<i64: 32, 16>}]} {
    %c0 = arith.constant 0 : index
    %c0_0 = arith.constant 0 : index
    %0 = vector.load %arg1[%c0, %c0_0] : memref<32x144xbf16, #tpu.memory_space<vmem>>, vector<32x144xbf16>
    %c0_1 = arith.constant 0 : index
    %c0_2 = arith.constant 0 : index
    %1 = vector.load %arg2[%c0_1, %c0_2] : memref<144x16xbf16, #tpu.memory_space<vmem>>, vector<144x16xbf16>
    %cst = arith.constant dense<0.000000e+00> : vector<32x16xf32>
    %2 = tpu.matmul %0, %1, %cst {dimension_numbers = #tpu.dot_dimension_numbers<[1], [0], [0], [1], [0, 0, 1, 1], [], []>} : vector<32x144xbf16>, vector<144x16xbf16>, vector<32x16xf32> -> vector<32x16xf32>
    %c0_3 = arith.constant 0 : index
    %c0_4 = arith.constant 0 : index
    %3 = vector.load %arg3[%c0_3, %c0_4] : memref<1x16xf32, #tpu.memory_space<vmem>>, vector<1x16xf32>
    %4 = vector.broadcast %3 : vector<1x16xf32> to vector<32x16xf32>
    %5 = arith.addf %2, %4 : vector<32x16xf32>
    %cst_5 = arith.constant 0.000000e+00 : f32
    %cst_6 = arith.constant 6.000000e+00 : f32
    %6 = vector.broadcast %cst_5 : f32 to vector<32x16xf32>
    %7 = arith.maximumf %6, %5 : vector<32x16xf32>
    %8 = vector.broadcast %cst_6 : f32 to vector<32x16xf32>
    %9 = arith.minimumf %8, %7 : vector<32x16xf32>
    %10 = arith.truncf %9 : vector<32x16xf32> to vector<32x16xbf16>
    %c0_7 = arith.constant 0 : index
    %c0_8 = arith.constant 0 : index
    %11 = vector.load %arg4[%c0_7, %c0_8] : memref<32x16xbf16, #tpu.memory_space<vmem>>, vector<32x16xbf16>
    tpu.vector_store %arg4[%c0_7, %c0_8], %10 {strides = array<i32>} : memref<32x16xbf16, #tpu.memory_space<vmem>>, vector<32x16xbf16>,
    return
  }
  func.func @transform_0(%arg0: i32) -> (i32, i32) {
    %c0_i32 = arith.constant 0 : i32
    %c0_i32_0 = arith.constant 0 : i32
    %c0_i32_1 = arith.constant 0 : i32
    return %c0_i32, %c0_i32_0 : i32, i32
  }
  func.func @transform_1(%arg0: i32) -> (i32, i32) {
    %c0_i32 = arith.constant 0 : i32
    %c0_i32_0 = arith.constant 0 : i32
    %c0_i32_1 = arith.constant 0 : i32
    return %c0_i32, %c0_i32_0 : i32, i32
  }
  func.func @transform_2(%arg0: i32) -> (i32, i32) {
    %c0_i32 = arith.constant 0 : i32
    %c0_i32_0 = arith.constant 0 : i32
    %c0_i32_1 = arith.constant 0 : i32
    return %c0_i32, %c0_i32_0 : i32, i32
  }
  func.func @transform_3(%arg0: i32) -> (i32, i32) {
    %c0_i32 = arith.constant 0 : i32
    %c0_i32_0 = arith.constant 0 : i32
    %c0_i32_1 = arith.constant 0 : i32
    return %c0_i32, %c0_i32_0 : i32, i32
  }
}

module attributes {stable_mosaic.version = 11 : i64} {
  func.func @_mm_kernel(%arg0: i32, %arg1: memref<8x16xbf16, #tpu.memory_space<vmem>>, %arg2: memref<16x8xbf16, #tpu.memory_space<vmem>>, %arg3: memref<1x8xf32, #tpu.memory_space<vmem>>, %arg4: memref<8x8xbf16, #tpu.memory_space<vmem>>) attributes {dimension_semantics = [#tpu.dimension_semantics<arbitrary>], iteration_bounds = array<i64: 1>, scalar_prefetch = 0 : i64, scratch_operands = 0 : i64, tpu.core_type = #tpu.core_type<tc>, window_params = [{pipeline_mode = #tpu.pipeline_mode<synchronous>, transform_indices = @transform_0, window_bounds = array<i64: 8, 16>}, {pipeline_mode = #tpu.pipeline_mode<synchronous>, transform_indices = @transform_1, window_bounds = array<i64: 16, 8>}, {pipeline_mode = #tpu.pipeline_mode<synchronous>, transform_indices = @transform_2, window_bounds = array<i64: 1, 8>}, {pipeline_mode = #tpu.pipeline_mode<synchronous>, transform_indices = @transform_3, window_bounds = array<i64: 8, 8>}]} {
    %c0 = arith.constant 0 : index
    %c0_0 = arith.constant 0 : index
    %0 = vector.load %arg1[%c0, %c0_0] : memref<8x16xbf16, #tpu.memory_space<vmem>>, vector<8x16xbf16>
    %c0_1 = arith.constant 0 : index
    %c0_2 = arith.constant 0 : index
    %1 = vector.load %arg2[%c0_1, %c0_2] : memref<16x8xbf16, #tpu.memory_space<vmem>>, vector<16x8xbf16>
    %cst = arith.constant dense<0.000000e+00> : vector<8x8xf32>
    %2 = tpu.matmul %0, %1, %cst {dimension_numbers = #tpu.dot_dimension_numbers<[1], [0], [0], [1], [0, 0, 1, 1], [], []>} : vector<8x16xbf16>, vector<16x8xbf16>, vector<8x8xf32> -> vector<8x8xf32>
    %c0_3 = arith.constant 0 : index
    %c0_4 = arith.constant 0 : index
    %3 = vector.load %arg3[%c0_3, %c0_4] : memref<1x8xf32, #tpu.memory_space<vmem>>, vector<1x8xf32>
    %4 = vector.broadcast %3 : vector<1x8xf32> to vector<8x8xf32>
    %5 = arith.addf %2, %4 : vector<8x8xf32>
    %cst_5 = arith.constant 0.000000e+00 : f32
    %cst_6 = arith.constant 6.000000e+00 : f32
    %6 = vector.broadcast %cst_5 : f32 to vector<8x8xf32>
    %7 = arith.maximumf %6, %5 : vector<8x8xf32>
    %8 = vector.broadcast %cst_6 : f32 to vector<8x8xf32>
    %9 = arith.minimumf %8, %7 : vector<8x8xf32>
    %10 = arith.truncf %9 : vector<8x8xf32> to vector<8x8xbf16>
    %c0_7 = arith.constant 0 : index
    %c0_8 = arith.constant 0 : index
    %11 = vector.load %arg4[%c0_7, %c0_8] : memref<8x8xbf16, #tpu.memory_space<vmem>>, vector<8x8xbf16>
    tpu.vector_store %arg4[%c0_7, %c0_8], %10 {strides = array<i32>} : memref<8x8xbf16, #tpu.memory_space<vmem>>, vector<8x8xbf16>,
    return
  }
  func.func @transform_0(%arg0: i32) -> (i32, i32) {
    %c0_i32 = arith.constant 0 : i32
    %c0_i32_0 = arith.constant 0 : i32
    %c0_i32_1 = arith.constant 0 : i32
    return %c0_i32, %c0_i32_0 : i32, i32
  }
  func.func @transform_1(%arg0: i32) -> (i32, i32) {
    %c0_i32 = arith.constant 0 : i32
    %c0_i32_0 = arith.constant 0 : i32
    %c0_i32_1 = arith.constant 0 : i32
    return %c0_i32, %c0_i32_0 : i32, i32
  }
  func.func @transform_2(%arg0: i32) -> (i32, i32) {
    %c0_i32 = arith.constant 0 : i32
    %c0_i32_0 = arith.constant 0 : i32
    %c0_i32_1 = arith.constant 0 : i32
    return %c0_i32, %c0_i32_0 : i32, i32
  }
  func.func @transform_3(%arg0: i32) -> (i32, i32) {
    %c0_i32 = arith.constant 0 : i32
    %c0_i32_0 = arith.constant 0 : i32
    %c0_i32_1 = arith.constant 0 : i32
    return %c0_i32, %c0_i32_0 : i32, i32
  }
}

module attributes {stable_mosaic.version = 11 : i64} {
  func.func @_mm_kernel(%arg0: i32, %arg1: memref<8x72xbf16, #tpu.memory_space<vmem>>, %arg2: memref<72x16xbf16, #tpu.memory_space<vmem>>, %arg3: memref<1x16xf32, #tpu.memory_space<vmem>>, %arg4: memref<8x16xbf16, #tpu.memory_space<vmem>>) attributes {dimension_semantics = [#tpu.dimension_semantics<arbitrary>], iteration_bounds = array<i64: 1>, scalar_prefetch = 0 : i64, scratch_operands = 0 : i64, tpu.core_type = #tpu.core_type<tc>, window_params = [{pipeline_mode = #tpu.pipeline_mode<synchronous>, transform_indices = @transform_0, window_bounds = array<i64: 8, 72>}, {pipeline_mode = #tpu.pipeline_mode<synchronous>, transform_indices = @transform_1, window_bounds = array<i64: 72, 16>}, {pipeline_mode = #tpu.pipeline_mode<synchronous>, transform_indices = @transform_2, window_bounds = array<i64: 1, 16>}, {pipeline_mode = #tpu.pipeline_mode<synchronous>, transform_indices = @transform_3, window_bounds = array<i64: 8, 16>}]} {
    %c0 = arith.constant 0 : index
    %c0_0 = arith.constant 0 : index
    %0 = vector.load %arg1[%c0, %c0_0] : memref<8x72xbf16, #tpu.memory_space<vmem>>, vector<8x72xbf16>
    %c0_1 = arith.constant 0 : index
    %c0_2 = arith.constant 0 : index
    %1 = vector.load %arg2[%c0_1, %c0_2] : memref<72x16xbf16, #tpu.memory_space<vmem>>, vector<72x16xbf16>
    %cst = arith.constant dense<0.000000e+00> : vector<8x16xf32>
    %2 = tpu.matmul %0, %1, %cst {dimension_numbers = #tpu.dot_dimension_numbers<[1], [0], [0], [1], [0, 0, 1, 1], [], []>} : vector<8x72xbf16>, vector<72x16xbf16>, vector<8x16xf32> -> vector<8x16xf32>
    %c0_3 = arith.constant 0 : index
    %c0_4 = arith.constant 0 : index
    %3 = vector.load %arg3[%c0_3, %c0_4] : memref<1x16xf32, #tpu.memory_space<vmem>>, vector<1x16xf32>
    %4 = vector.broadcast %3 : vector<1x16xf32> to vector<8x16xf32>
    %5 = arith.addf %2, %4 : vector<8x16xf32>
    %cst_5 = arith.constant 0.000000e+00 : f32
    %cst_6 = arith.constant 6.000000e+00 : f32
    %6 = vector.broadcast %cst_5 : f32 to vector<8x16xf32>
    %7 = arith.maximumf %6, %5 : vector<8x16xf32>
    %8 = vector.broadcast %cst_6 : f32 to vector<8x16xf32>
    %9 = arith.minimumf %8, %7 : vector<8x16xf32>
    %10 = arith.truncf %9 : vector<8x16xf32> to vector<8x16xbf16>
    %c0_7 = arith.constant 0 : index
    %c0_8 = arith.constant 0 : index
    %11 = vector.load %arg4[%c0_7, %c0_8] : memref<8x16xbf16, #tpu.memory_space<vmem>>, vector<8x16xbf16>
    tpu.vector_store %arg4[%c0_7, %c0_8], %10 {strides = array<i32>} : memref<8x16xbf16, #tpu.memory_space<vmem>>, vector<8x16xbf16>,
    return
  }
  func.func @transform_0(%arg0: i32) -> (i32, i32) {
    %c0_i32 = arith.constant 0 : i32
    %c0_i32_0 = arith.constant 0 : i32
    %c0_i32_1 = arith.constant 0 : i32
    return %c0_i32, %c0_i32_0 : i32, i32
  }
  func.func @transform_1(%arg0: i32) -> (i32, i32) {
    %c0_i32 = arith.constant 0 : i32
    %c0_i32_0 = arith.constant 0 : i32
    %c0_i32_1 = arith.constant 0 : i32
    return %c0_i32, %c0_i32_0 : i32, i32
  }
  func.func @transform_2(%arg0: i32) -> (i32, i32) {
    %c0_i32 = arith.constant 0 : i32
    %c0_i32_0 = arith.constant 0 : i32
    %c0_i32_1 = arith.constant 0 : i32
    return %c0_i32, %c0_i32_0 : i32, i32
  }
  func.func @transform_3(%arg0: i32) -> (i32, i32) {
    %c0_i32 = arith.constant 0 : i32
    %c0_i32_0 = arith.constant 0 : i32
    %c0_i32_1 = arith.constant 0 : i32
    return %c0_i32, %c0_i32_0 : i32, i32
  }
}

module attributes {stable_mosaic.version = 11 : i64} {
  func.func @_mm_kernel(%arg0: i32, %arg1: memref<2x72xbf16, #tpu.memory_space<vmem>>, %arg2: memref<72x16xbf16, #tpu.memory_space<vmem>>, %arg3: memref<1x16xf32, #tpu.memory_space<vmem>>, %arg4: memref<2x16xbf16, #tpu.memory_space<vmem>>) attributes {dimension_semantics = [#tpu.dimension_semantics<arbitrary>], iteration_bounds = array<i64: 1>, scalar_prefetch = 0 : i64, scratch_operands = 0 : i64, tpu.core_type = #tpu.core_type<tc>, window_params = [{pipeline_mode = #tpu.pipeline_mode<synchronous>, transform_indices = @transform_0, window_bounds = array<i64: 2, 72>}, {pipeline_mode = #tpu.pipeline_mode<synchronous>, transform_indices = @transform_1, window_bounds = array<i64: 72, 16>}, {pipeline_mode = #tpu.pipeline_mode<synchronous>, transform_indices = @transform_2, window_bounds = array<i64: 1, 16>}, {pipeline_mode = #tpu.pipeline_mode<synchronous>, transform_indices = @transform_3, window_bounds = array<i64: 2, 16>}]} {
    %c0 = arith.constant 0 : index
    %c0_0 = arith.constant 0 : index
    %0 = vector.load %arg1[%c0, %c0_0] : memref<2x72xbf16, #tpu.memory_space<vmem>>, vector<2x72xbf16>
    %c0_1 = arith.constant 0 : index
    %c0_2 = arith.constant 0 : index
    %1 = vector.load %arg2[%c0_1, %c0_2] : memref<72x16xbf16, #tpu.memory_space<vmem>>, vector<72x16xbf16>
    %cst = arith.constant dense<0.000000e+00> : vector<2x16xf32>
    %2 = tpu.matmul %0, %1, %cst {dimension_numbers = #tpu.dot_dimension_numbers<[1], [0], [0], [1], [0, 0, 1, 1], [], []>} : vector<2x72xbf16>, vector<72x16xbf16>, vector<2x16xf32> -> vector<2x16xf32>
    %c0_3 = arith.constant 0 : index
    %c0_4 = arith.constant 0 : index
    %3 = vector.load %arg3[%c0_3, %c0_4] : memref<1x16xf32, #tpu.memory_space<vmem>>, vector<1x16xf32>
    %4 = vector.broadcast %3 : vector<1x16xf32> to vector<2x16xf32>
    %5 = arith.addf %2, %4 : vector<2x16xf32>
    %cst_5 = arith.constant 0.000000e+00 : f32
    %cst_6 = arith.constant 6.000000e+00 : f32
    %6 = vector.broadcast %cst_5 : f32 to vector<2x16xf32>
    %7 = arith.maximumf %6, %5 : vector<2x16xf32>
    %8 = vector.broadcast %cst_6 : f32 to vector<2x16xf32>
    %9 = arith.minimumf %8, %7 : vector<2x16xf32>
    %10 = arith.truncf %9 : vector<2x16xf32> to vector<2x16xbf16>
    %c0_7 = arith.constant 0 : index
    %c0_8 = arith.constant 0 : index
    %11 = vector.load %arg4[%c0_7, %c0_8] : memref<2x16xbf16, #tpu.memory_space<vmem>>, vector<2x16xbf16>
    tpu.vector_store %arg4[%c0_7, %c0_8], %10 {strides = array<i32>} : memref<2x16xbf16, #tpu.memory_space<vmem>>, vector<2x16xbf16>,
    return
  }
  func.func @transform_0(%arg0: i32) -> (i32, i32) {
    %c0_i32 = arith.constant 0 : i32
    %c0_i32_0 = arith.constant 0 : i32
    %c0_i32_1 = arith.constant 0 : i32
    return %c0_i32, %c0_i32_0 : i32, i32
  }
  func.func @transform_1(%arg0: i32) -> (i32, i32) {
    %c0_i32 = arith.constant 0 : i32
    %c0_i32_0 = arith.constant 0 : i32
    %c0_i32_1 = arith.constant 0 : i32
    return %c0_i32, %c0_i32_0 : i32, i32
  }
  func.func @transform_2(%arg0: i32) -> (i32, i32) {
    %c0_i32 = arith.constant 0 : i32
    %c0_i32_0 = arith.constant 0 : i32
    %c0_i32_1 = arith.constant 0 : i32
    return %c0_i32, %c0_i32_0 : i32, i32
  }
  func.func @transform_3(%arg0: i32) -> (i32, i32) {
    %c0_i32 = arith.constant 0 : i32
    %c0_i32_0 = arith.constant 0 : i32
    %c0_i32_1 = arith.constant 0 : i32
    return %c0_i32, %c0_i32_0 : i32, i32
  }
}

module attributes {stable_mosaic.version = 11 : i64} {
  func.func @_mm_kernel(%arg0: i32, %arg1: memref<2x16xbf16, #tpu.memory_space<vmem>>, %arg2: memref<16x24xbf16, #tpu.memory_space<vmem>>, %arg3: memref<1x24xf32, #tpu.memory_space<vmem>>, %arg4: memref<2x24xf32, #tpu.memory_space<vmem>>) attributes {dimension_semantics = [#tpu.dimension_semantics<arbitrary>], iteration_bounds = array<i64: 1>, scalar_prefetch = 0 : i64, scratch_operands = 0 : i64, tpu.core_type = #tpu.core_type<tc>, window_params = [{pipeline_mode = #tpu.pipeline_mode<synchronous>, transform_indices = @transform_0, window_bounds = array<i64: 2, 16>}, {pipeline_mode = #tpu.pipeline_mode<synchronous>, transform_indices = @transform_1, window_bounds = array<i64: 16, 24>}, {pipeline_mode = #tpu.pipeline_mode<synchronous>, transform_indices = @transform_2, window_bounds = array<i64: 1, 24>}, {pipeline_mode = #tpu.pipeline_mode<synchronous>, transform_indices = @transform_3, window_bounds = array<i64: 2, 24>}]} {
    %c0 = arith.constant 0 : index
    %c0_0 = arith.constant 0 : index
    %0 = vector.load %arg1[%c0, %c0_0] : memref<2x16xbf16, #tpu.memory_space<vmem>>, vector<2x16xbf16>
    %c0_1 = arith.constant 0 : index
    %c0_2 = arith.constant 0 : index
    %1 = vector.load %arg2[%c0_1, %c0_2] : memref<16x24xbf16, #tpu.memory_space<vmem>>, vector<16x24xbf16>
    %cst = arith.constant dense<0.000000e+00> : vector<2x24xf32>
    %2 = tpu.matmul %0, %1, %cst {dimension_numbers = #tpu.dot_dimension_numbers<[1], [0], [0], [1], [0, 0, 1, 1], [], []>} : vector<2x16xbf16>, vector<16x24xbf16>, vector<2x24xf32> -> vector<2x24xf32>
    %c0_3 = arith.constant 0 : index
    %c0_4 = arith.constant 0 : index
    %3 = vector.load %arg3[%c0_3, %c0_4] : memref<1x24xf32, #tpu.memory_space<vmem>>, vector<1x24xf32>
    %4 = vector.broadcast %3 : vector<1x24xf32> to vector<2x24xf32>
    %5 = arith.addf %2, %4 : vector<2x24xf32>
    %6 = tpu.iota {dimensions = array<i32: 1>} : vector<2x24xi32>
    %c12_i32 = arith.constant 12 : i32
    %7 = vector.broadcast %c12_i32 : i32 to vector<2x24xi32>
    %8 = arith.cmpi slt, %6, %7 : vector<2x24xi32>
    %9 = arith.negf %5 : vector<2x24xf32>
    %10 = math.exp %9 : vector<2x24xf32>
    %cst_5 = arith.constant 1.000000e+00 : f32
    %11 = vector.broadcast %cst_5 : f32 to vector<2x24xf32>
    %12 = arith.addf %11, %10 : vector<2x24xf32>
    %13 = arith.divf %11, %12 : vector<2x24xf32>
    %14 = arith.select %8, %13, %5 : vector<2x24xi1>, vector<2x24xf32>
    %c0_6 = arith.constant 0 : index
    %c0_7 = arith.constant 0 : index
    %15 = vector.load %arg4[%c0_6, %c0_7] : memref<2x24xf32, #tpu.memory_space<vmem>>, vector<2x24xf32>
    tpu.vector_store %arg4[%c0_6, %c0_7], %14 {strides = array<i32>} : memref<2x24xf32, #tpu.memory_space<vmem>>, vector<2x24xf32>,
    return
  }
  func.func @transform_0(%arg0: i32) -> (i32, i32) {
    %c0_i32 = arith.constant 0 : i32
    %c0_i32_0 = arith.constant 0 : i32
    %c0_i32_1 = arith.constant 0 : i32
    return %c0_i32, %c0_i32_0 : i32, i32
  }
  func.func @transform_1(%arg0: i32) -> (i32, i32) {
    %c0_i32 = arith.constant 0 : i32
    %c0_i32_0 = arith.constant 0 : i32
    %c0_i32_1 = arith.constant 0 : i32
    return %c0_i32, %c0_i32_0 : i32, i32
  }
  func.func @transform_2(%arg0: i32) -> (i32, i32) {
    %c0_i32 = arith.constant 0 : i32
    %c0_i32_0 = arith.constant 0 : i32
    %c0_i32_1 = arith.constant 0 : i32
    return %c0_i32, %c0_i32_0 : i32, i32
  }
  func.func @transform_3(%arg0: i32) -> (i32, i32) {
    %c0_i32 = arith.constant 0 : i32
    %c0_i32_0 = arith.constant 0 : i32
    %c0_i32_1 = arith.constant 0 : i32
    return %c0_i32, %c0_i32_0 : i32, i32
  }
}

module attributes {stable_mosaic.version = 11 : i64} {
  func.func @_mm_kernel(%arg0: i32, %arg1: memref<8x16xbf16, #tpu.memory_space<vmem>>, %arg2: memref<16x24xbf16, #tpu.memory_space<vmem>>, %arg3: memref<1x24xf32, #tpu.memory_space<vmem>>, %arg4: memref<8x24xf32, #tpu.memory_space<vmem>>) attributes {dimension_semantics = [#tpu.dimension_semantics<arbitrary>], iteration_bounds = array<i64: 1>, scalar_prefetch = 0 : i64, scratch_operands = 0 : i64, tpu.core_type = #tpu.core_type<tc>, window_params = [{pipeline_mode = #tpu.pipeline_mode<synchronous>, transform_indices = @transform_0, window_bounds = array<i64: 8, 16>}, {pipeline_mode = #tpu.pipeline_mode<synchronous>, transform_indices = @transform_1, window_bounds = array<i64: 16, 24>}, {pipeline_mode = #tpu.pipeline_mode<synchronous>, transform_indices = @transform_2, window_bounds = array<i64: 1, 24>}, {pipeline_mode = #tpu.pipeline_mode<synchronous>, transform_indices = @transform_3, window_bounds = array<i64: 8, 24>}]} {
    %c0 = arith.constant 0 : index
    %c0_0 = arith.constant 0 : index
    %0 = vector.load %arg1[%c0, %c0_0] : memref<8x16xbf16, #tpu.memory_space<vmem>>, vector<8x16xbf16>
    %c0_1 = arith.constant 0 : index
    %c0_2 = arith.constant 0 : index
    %1 = vector.load %arg2[%c0_1, %c0_2] : memref<16x24xbf16, #tpu.memory_space<vmem>>, vector<16x24xbf16>
    %cst = arith.constant dense<0.000000e+00> : vector<8x24xf32>
    %2 = tpu.matmul %0, %1, %cst {dimension_numbers = #tpu.dot_dimension_numbers<[1], [0], [0], [1], [0, 0, 1, 1], [], []>} : vector<8x16xbf16>, vector<16x24xbf16>, vector<8x24xf32> -> vector<8x24xf32>
    %c0_3 = arith.constant 0 : index
    %c0_4 = arith.constant 0 : index
    %3 = vector.load %arg3[%c0_3, %c0_4] : memref<1x24xf32, #tpu.memory_space<vmem>>, vector<1x24xf32>
    %4 = vector.broadcast %3 : vector<1x24xf32> to vector<8x24xf32>
    %5 = arith.addf %2, %4 : vector<8x24xf32>
    %6 = tpu.iota {dimensions = array<i32: 1>} : vector<8x24xi32>
    %c12_i32 = arith.constant 12 : i32
    %7 = vector.broadcast %c12_i32 : i32 to vector<8x24xi32>
    %8 = arith.cmpi slt, %6, %7 : vector<8x24xi32>
    %9 = arith.negf %5 : vector<8x24xf32>
    %10 = math.exp %9 : vector<8x24xf32>
    %cst_5 = arith.constant 1.000000e+00 : f32
    %11 = vector.broadcast %cst_5 : f32 to vector<8x24xf32>
    %12 = arith.addf %11, %10 : vector<8x24xf32>
    %13 = arith.divf %11, %12 : vector<8x24xf32>
    %14 = arith.select %8, %13, %5 : vector<8x24xi1>, vector<8x24xf32>
    %c0_6 = arith.constant 0 : index
    %c0_7 = arith.constant 0 : index
    %15 = vector.load %arg4[%c0_6, %c0_7] : memref<8x24xf32, #tpu.memory_space<vmem>>, vector<8x24xf32>
    tpu.vector_store %arg4[%c0_6, %c0_7], %14 {strides = array<i32>} : memref<8x24xf32, #tpu.memory_space<vmem>>, vector<8x24xf32>,
    return
  }
  func.func @transform_0(%arg0: i32) -> (i32, i32) {
    %c0_i32 = arith.constant 0 : i32
    %c0_i32_0 = arith.constant 0 : i32
    %c0_i32_1 = arith.constant 0 : i32
    return %c0_i32, %c0_i32_0 : i32, i32
  }
  func.func @transform_1(%arg0: i32) -> (i32, i32) {
    %c0_i32 = arith.constant 0 : i32
    %c0_i32_0 = arith.constant 0 : i32
    %c0_i32_1 = arith.constant 0 : i32
    return %c0_i32, %c0_i32_0 : i32, i32
  }
  func.func @transform_2(%arg0: i32) -> (i32, i32) {
    %c0_i32 = arith.constant 0 : i32
    %c0_i32_0 = arith.constant 0 : i32
    %c0_i32_1 = arith.constant 0 : i32
    return %c0_i32, %c0_i32_0 : i32, i32
  }
  func.func @transform_3(%arg0: i32) -> (i32, i32) {
    %c0_i32 = arith.constant 0 : i32
    %c0_i32_0 = arith.constant 0 : i32
    %c0_i32_1 = arith.constant 0 : i32
    return %c0_i32, %c0_i32_0 : i32, i32
  }
}

module attributes {stable_mosaic.version = 11 : i64} {
  func.func @_mm_kernel(%arg0: i32, %arg1: memref<32x16xbf16, #tpu.memory_space<vmem>>, %arg2: memref<16x24xbf16, #tpu.memory_space<vmem>>, %arg3: memref<1x24xf32, #tpu.memory_space<vmem>>, %arg4: memref<32x24xf32, #tpu.memory_space<vmem>>) attributes {dimension_semantics = [#tpu.dimension_semantics<arbitrary>], iteration_bounds = array<i64: 1>, scalar_prefetch = 0 : i64, scratch_operands = 0 : i64, tpu.core_type = #tpu.core_type<tc>, window_params = [{pipeline_mode = #tpu.pipeline_mode<synchronous>, transform_indices = @transform_0, window_bounds = array<i64: 32, 16>}, {pipeline_mode = #tpu.pipeline_mode<synchronous>, transform_indices = @transform_1, window_bounds = array<i64: 16, 24>}, {pipeline_mode = #tpu.pipeline_mode<synchronous>, transform_indices = @transform_2, window_bounds = array<i64: 1, 24>}, {pipeline_mode = #tpu.pipeline_mode<synchronous>, transform_indices = @transform_3, window_bounds = array<i64: 32, 24>}]} {
    %c0 = arith.constant 0 : index
    %c0_0 = arith.constant 0 : index
    %0 = vector.load %arg1[%c0, %c0_0] : memref<32x16xbf16, #tpu.memory_space<vmem>>, vector<32x16xbf16>
    %c0_1 = arith.constant 0 : index
    %c0_2 = arith.constant 0 : index
    %1 = vector.load %arg2[%c0_1, %c0_2] : memref<16x24xbf16, #tpu.memory_space<vmem>>, vector<16x24xbf16>
    %cst = arith.constant dense<0.000000e+00> : vector<32x24xf32>
    %2 = tpu.matmul %0, %1, %cst {dimension_numbers = #tpu.dot_dimension_numbers<[1], [0], [0], [1], [0, 0, 1, 1], [], []>} : vector<32x16xbf16>, vector<16x24xbf16>, vector<32x24xf32> -> vector<32x24xf32>
    %c0_3 = arith.constant 0 : index
    %c0_4 = arith.constant 0 : index
    %3 = vector.load %arg3[%c0_3, %c0_4] : memref<1x24xf32, #tpu.memory_space<vmem>>, vector<1x24xf32>
    %4 = vector.broadcast %3 : vector<1x24xf32> to vector<32x24xf32>
    %5 = arith.addf %2, %4 : vector<32x24xf32>
    %6 = tpu.iota {dimensions = array<i32: 1>} : vector<32x24xi32>
    %c12_i32 = arith.constant 12 : i32
    %7 = vector.broadcast %c12_i32 : i32 to vector<32x24xi32>
    %8 = arith.cmpi slt, %6, %7 : vector<32x24xi32>
    %9 = arith.negf %5 : vector<32x24xf32>
    %10 = math.exp %9 : vector<32x24xf32>
    %cst_5 = arith.constant 1.000000e+00 : f32
    %11 = vector.broadcast %cst_5 : f32 to vector<32x24xf32>
    %12 = arith.addf %11, %10 : vector<32x24xf32>
    %13 = arith.divf %11, %12 : vector<32x24xf32>
    %14 = arith.select %8, %13, %5 : vector<32x24xi1>, vector<32x24xf32>
    %c0_6 = arith.constant 0 : index
    %c0_7 = arith.constant 0 : index
    %15 = vector.load %arg4[%c0_6, %c0_7] : memref<32x24xf32, #tpu.memory_space<vmem>>, vector<32x24xf32>
    tpu.vector_store %arg4[%c0_6, %c0_7], %14 {strides = array<i32>} : memref<32x24xf32, #tpu.memory_space<vmem>>, vector<32x24xf32>,
    return
  }
  func.func @transform_0(%arg0: i32) -> (i32, i32) {
    %c0_i32 = arith.constant 0 : i32
    %c0_i32_0 = arith.constant 0 : i32
    %c0_i32_1 = arith.constant 0 : i32
    return %c0_i32, %c0_i32_0 : i32, i32
  }
  func.func @transform_1(%arg0: i32) -> (i32, i32) {
    %c0_i32 = arith.constant 0 : i32
    %c0_i32_0 = arith.constant 0 : i32
    %c0_i32_1 = arith.constant 0 : i32
    return %c0_i32, %c0_i32_0 : i32, i32
  }
  func.func @transform_2(%arg0: i32) -> (i32, i32) {
    %c0_i32 = arith.constant 0 : i32
    %c0_i32_0 = arith.constant 0 : i32
    %c0_i32_1 = arith.constant 0 : i32
    return %c0_i32, %c0_i32_0 : i32, i32
  }
  func.func @transform_3(%arg0: i32) -> (i32, i32) {
    %c0_i32 = arith.constant 0 : i32
    %c0_i32_0 = arith.constant 0 : i32
    %c0_i32_1 = arith.constant 0 : i32
    return %c0_i32, %c0_i32_0 : i32, i32
  }
}

module attributes {stable_mosaic.version = 11 : i64} {
  func.func @_mm_kernel(%arg0: i32, %arg1: memref<128x16xbf16, #tpu.memory_space<vmem>>, %arg2: memref<16x24xbf16, #tpu.memory_space<vmem>>, %arg3: memref<1x24xf32, #tpu.memory_space<vmem>>, %arg4: memref<128x24xf32, #tpu.memory_space<vmem>>) attributes {dimension_semantics = [#tpu.dimension_semantics<arbitrary>], iteration_bounds = array<i64: 1>, scalar_prefetch = 0 : i64, scratch_operands = 0 : i64, tpu.core_type = #tpu.core_type<tc>, window_params = [{pipeline_mode = #tpu.pipeline_mode<synchronous>, transform_indices = @transform_0, window_bounds = array<i64: 128, 16>}, {pipeline_mode = #tpu.pipeline_mode<synchronous>, transform_indices = @transform_1, window_bounds = array<i64: 16, 24>}, {pipeline_mode = #tpu.pipeline_mode<synchronous>, transform_indices = @transform_2, window_bounds = array<i64: 1, 24>}, {pipeline_mode = #tpu.pipeline_mode<synchronous>, transform_indices = @transform_3, window_bounds = array<i64: 128, 24>}]} {
    %c0 = arith.constant 0 : index
    %c0_0 = arith.constant 0 : index
    %0 = vector.load %arg1[%c0, %c0_0] : memref<128x16xbf16, #tpu.memory_space<vmem>>, vector<128x16xbf16>
    %c0_1 = arith.constant 0 : index
    %c0_2 = arith.constant 0 : index
    %1 = vector.load %arg2[%c0_1, %c0_2] : memref<16x24xbf16, #tpu.memory_space<vmem>>, vector<16x24xbf16>
    %cst = arith.constant dense<0.000000e+00> : vector<128x24xf32>
    %2 = tpu.matmul %0, %1, %cst {dimension_numbers = #tpu.dot_dimension_numbers<[1], [0], [0], [1], [0, 0, 1, 1], [], []>} : vector<128x16xbf16>, vector<16x24xbf16>, vector<128x24xf32> -> vector<128x24xf32>
    %c0_3 = arith.constant 0 : index
    %c0_4 = arith.constant 0 : index
    %3 = vector.load %arg3[%c0_3, %c0_4] : memref<1x24xf32, #tpu.memory_space<vmem>>, vector<1x24xf32>
    %4 = vector.broadcast %3 : vector<1x24xf32> to vector<128x24xf32>
    %5 = arith.addf %2, %4 : vector<128x24xf32>
    %6 = tpu.iota {dimensions = array<i32: 1>} : vector<128x24xi32>
    %c12_i32 = arith.constant 12 : i32
    %7 = vector.broadcast %c12_i32 : i32 to vector<128x24xi32>
    %8 = arith.cmpi slt, %6, %7 : vector<128x24xi32>
    %9 = arith.negf %5 : vector<128x24xf32>
    %10 = math.exp %9 : vector<128x24xf32>
    %cst_5 = arith.constant 1.000000e+00 : f32
    %11 = vector.broadcast %cst_5 : f32 to vector<128x24xf32>
    %12 = arith.addf %11, %10 : vector<128x24xf32>
    %13 = arith.divf %11, %12 : vector<128x24xf32>
    %14 = arith.select %8, %13, %5 : vector<128x24xi1>, vector<128x24xf32>
    %c0_6 = arith.constant 0 : index
    %c0_7 = arith.constant 0 : index
    %15 = vector.load %arg4[%c0_6, %c0_7] : memref<128x24xf32, #tpu.memory_space<vmem>>, vector<128x24xf32>
    tpu.vector_store %arg4[%c0_6, %c0_7], %14 {strides = array<i32>} : memref<128x24xf32, #tpu.memory_space<vmem>>, vector<128x24xf32>,
    return
  }
  func.func @transform_0(%arg0: i32) -> (i32, i32) {
    %c0_i32 = arith.constant 0 : i32
    %c0_i32_0 = arith.constant 0 : i32
    %c0_i32_1 = arith.constant 0 : i32
    return %c0_i32, %c0_i32_0 : i32, i32
  }
  func.func @transform_1(%arg0: i32) -> (i32, i32) {
    %c0_i32 = arith.constant 0 : i32
    %c0_i32_0 = arith.constant 0 : i32
    %c0_i32_1 = arith.constant 0 : i32
    return %c0_i32, %c0_i32_0 : i32, i32
  }
  func.func @transform_2(%arg0: i32) -> (i32, i32) {
    %c0_i32 = arith.constant 0 : i32
    %c0_i32_0 = arith.constant 0 : i32
    %c0_i32_1 = arith.constant 0 : i32
    return %c0_i32, %c0_i32_0 : i32, i32
  }
  func.func @transform_3(%arg0: i32) -> (i32, i32) {
    %c0_i32 = arith.constant 0 : i32
    %c0_i32_0 = arith.constant 0 : i32
    %c0_i32_1 = arith.constant 0 : i32
    return %c0_i32, %c0_i32_0 : i32, i32
  }
}

module attributes {stable_mosaic.version = 11 : i64} {
  func.func @_decode_kernel(%arg0: i32, %arg1: memref<4x510xf32, #tpu.memory_space<vmem>>, %arg2: memref<4x510xf32, #tpu.memory_space<vmem>>, %arg3: memref<4x510xf32, #tpu.memory_space<vmem>>) attributes {dimension_semantics = [#tpu.dimension_semantics<arbitrary>], iteration_bounds = array<i64: 1>, scalar_prefetch = 0 : i64, scratch_operands = 0 : i64, tpu.core_type = #tpu.core_type<tc>, window_params = [{pipeline_mode = #tpu.pipeline_mode<synchronous>, transform_indices = @transform_0, window_bounds = array<i64: 4, 510>}, {pipeline_mode = #tpu.pipeline_mode<synchronous>, transform_indices = @transform_1, window_bounds = array<i64: 4, 510>}, {pipeline_mode = #tpu.pipeline_mode<synchronous>, transform_indices = @transform_2, window_bounds = array<i64: 4, 510>}]} {
    %c0 = arith.constant 0 : index
    %c0_0 = arith.constant 0 : index
    %0 = vector.load %arg1[%c0, %c0_0] : memref<4x510xf32, #tpu.memory_space<vmem>>, vector<1x510xf32>
    %cst = arith.constant 1.000000e-01 : f32
    %1 = vector.broadcast %cst : f32 to vector<1x510xf32>
    %2 = arith.mulf %0, %1 : vector<1x510xf32>
    %c1 = arith.constant 1 : index
    %c0_1 = arith.constant 0 : index
    %3 = vector.load %arg1[%c1, %c0_1] : memref<4x510xf32, #tpu.memory_space<vmem>>, vector<1x510xf32>
    %cst_2 = arith.constant 1.000000e-01 : f32
    %4 = vector.broadcast %cst_2 : f32 to vector<1x510xf32>
    %5 = arith.mulf %3, %4 : vector<1x510xf32>
    %c2 = arith.constant 2 : index
    %c0_3 = arith.constant 0 : index
    %6 = vector.load %arg1[%c2, %c0_3] : memref<4x510xf32, #tpu.memory_space<vmem>>, vector<1x510xf32>
    %cst_4 = arith.constant 2.000000e-01 : f32
    %7 = vector.broadcast %cst_4 : f32 to vector<1x510xf32>
    %8 = arith.mulf %6, %7 : vector<1x510xf32>
    %c3 = arith.constant 3 : index
    %c0_5 = arith.constant 0 : index
    %9 = vector.load %arg1[%c3, %c0_5] : memref<4x510xf32, #tpu.memory_space<vmem>>, vector<1x510xf32>
    %cst_6 = arith.constant 2.000000e-01 : f32
    %10 = vector.broadcast %cst_6 : f32 to vector<1x510xf32>
    %11 = arith.mulf %9, %10 : vector<1x510xf32>
    %c0_7 = arith.constant 0 : index
    %c0_8 = arith.constant 0 : index
    %12 = vector.load %arg2[%c0_7, %c0_8] : memref<4x510xf32, #tpu.memory_space<vmem>>, vector<1x510xf32>
    %c1_9 = arith.constant 1 : index
    %c0_10 = arith.constant 0 : index
    %13 = vector.load %arg2[%c1_9, %c0_10] : memref<4x510xf32, #tpu.memory_space<vmem>>, vector<1x510xf32>
    %c2_11 = arith.constant 2 : index
    %c0_12 = arith.constant 0 : index
    %14 = vector.load %arg2[%c2_11, %c0_12] : memref<4x510xf32, #tpu.memory_space<vmem>>, vector<1x510xf32>
    %c3_13 = arith.constant 3 : index
    %c0_14 = arith.constant 0 : index
    %15 = vector.load %arg2[%c3_13, %c0_14] : memref<4x510xf32, #tpu.memory_space<vmem>>, vector<1x510xf32>
    %16 = math.exp %8 : vector<1x510xf32>
    %17 = arith.mulf %16, %14 : vector<1x510xf32>
    %cst_15 = arith.constant 5.000000e-01 : f32
    %18 = vector.broadcast %cst_15 : f32 to vector<1x510xf32>
    %19 = arith.mulf %17, %18 : vector<1x510xf32>
    %20 = math.exp %11 : vector<1x510xf32>
    %21 = arith.mulf %20, %15 : vector<1x510xf32>
    %cst_16 = arith.constant 5.000000e-01 : f32
    %22 = vector.broadcast %cst_16 : f32 to vector<1x510xf32>
    %23 = arith.mulf %21, %22 : vector<1x510xf32>
    %24 = arith.mulf %2, %14 : vector<1x510xf32>
    %25 = arith.addf %24, %12 : vector<1x510xf32>
    %26 = arith.mulf %5, %15 : vector<1x510xf32>
    %27 = arith.addf %26, %13 : vector<1x510xf32>
    %28 = arith.subf %25, %19 : vector<1x510xf32>
    %29 = arith.subf %27, %23 : vector<1x510xf32>
    %30 = arith.addf %25, %19 : vector<1x510xf32>
    %31 = arith.addf %27, %23 : vector<1x510xf32>
    %32 = tpu.concatenate %28, %29, %30, %31 in 0 : vector<1x510xf32>, vector<1x510xf32>, vector<1x510xf32>, vector<1x510xf32> -> vector<4x510xf32>
    %c0_17 = arith.constant 0 : index
    %c0_18 = arith.constant 0 : index
    %33 = vector.load %arg3[%c0_17, %c0_18] : memref<4x510xf32, #tpu.memory_space<vmem>>, vector<4x510xf32>
    tpu.vector_store %arg3[%c0_17, %c0_18], %32 {strides = array<i32>} : memref<4x510xf32, #tpu.memory_space<vmem>>, vector<4x510xf32>,
    return
  }
  func.func @transform_0(%arg0: i32) -> (i32, i32) {
    %c0_i32 = arith.constant 0 : i32
    %c0_i32_0 = arith.constant 0 : i32
    %c0_i32_1 = arith.constant 0 : i32
    return %c0_i32, %c0_i32_0 : i32, i32
  }
  func.func @transform_1(%arg0: i32) -> (i32, i32) {
    %c0_i32 = arith.constant 0 : i32
    %c0_i32_0 = arith.constant 0 : i32
    %c0_i32_1 = arith.constant 0 : i32
    return %c0_i32, %c0_i32_0 : i32, i32
  }
  func.func @transform_2(%arg0: i32) -> (i32, i32) {
    %c0_i32 = arith.constant 0 : i32
    %c0_i32_0 = arith.constant 0 : i32
    %c0_i32_1 = arith.constant 0 : i32
    return %c0_i32, %c0_i32_0 : i32, i32
  }
}

</mosaic_0001>

<llo_original>
// kernel: ssd_model.13
$region0: #{ssd_model.13}
  #allocation0 [shape = 'u32[]', space=smem, size = 0x4, offset = 0x4, fixed_abs, tag = 'smem constant byte address 0x4 - core index']
  #allocation1 [shape = 'u32[72,128]{1,0:T(1,128)}', space=vmem, size = 0x9000, scoped, tag = 'internal scratch']
  %s0 = inlined_call_operand.vmem [shape: bf16[128,8], index: 0, kind: input, shape index: {}]
  %s1 = inlined_call_operand.vmem [shape: bf16[8,16], index: 1, kind: input, shape index: {}]
  %s2 = inlined_call_operand.vmem [shape: f32[1,16], index: 2, kind: input, shape index: {}]
  %s3 = inlined_call_operand.vmem [shape: bf16[128,16], index: 3, kind: output, shape index: {}]
  %s4 = sld [smem:[#allocation0]]
  $region22: #{ssd_model.13} parent=0
    _
  %s6 = ssub.s32 1, %s4
  %s7 = scalar_select 0, %s6, %s4
  // Predicated region
  $region2: #{ssd_model.13} parent=0 // pred_check
    _
  $region3: #{ssd_model.13} parent=0 // pred_check_branch
    %9 = sbr.rel (0) target = $region5
  $region4: #{ssd_model.13} parent=0 // pred_region
    _
  $region5: #{ssd_model.13} parent=0 // pred_fallthru
    _
  // Predicated region
  $region6: #{ssd_model.13} parent=0 // pred_check
    _
  $region7: #{ssd_model.13} parent=0 // pred_check_branch
    %11 = sbr.rel (0) target = $region9
  $region8: #{ssd_model.13} parent=0 // pred_region
    _
  $region9: #{ssd_model.13} parent=0 // pred_fallthru
    _
  // Predicated region
  $region10: #{ssd_model.13} parent=0 // pred_check
    _
  $region11: #{ssd_model.13} parent=0 // pred_check_branch
    %13 = sbr.rel (0) target = $region13
  $region12: #{ssd_model.13} parent=0 // pred_region
    _
  $region13: #{ssd_model.13} parent=0 // pred_fallthru
    _
  %v15 = vld [vmem:[%s0] sm:$0xf]
  %v16 = vld [vmem:[%s0 + $0x4] sm:$0xf]
  %v17 = vld [vmem:[%s0 + $0x8] sm:$0xf]
  %v18 = vld [vmem:[%s0 + $0xc] sm:$0xf]
  %v19 = vld [vmem:[%s0 + $0x10] sm:$0xf]
  %v20 = vld [vmem:[%s0 + $0x14] sm:$0xf]
  %v21 = vld [vmem:[%s0 + $0x18] sm:$0xf]
  %v22 = vld [vmem:[%s0 + $0x1c] sm:$0xf]
  %v23 = vld [vmem:[%s0 + $0x20] sm:$0xf]
  %v24 = vld [vmem:[%s0 + $0x24] sm:$0xf]
  %v25 = vld [vmem:[%s0 + $0x28] sm:$0xf]
  %v26 = vld [vmem:[%s0 + $0x2c] sm:$0xf]
  %v27 = vld [vmem:[%s0 + $0x30] sm:$0xf]
  %v28 = vld [vmem:[%s0 + $0x34] sm:$0xf]
  %v29 = vld [vmem:[%s0 + $0x38] sm:$0xf]
  %v30 = vld [vmem:[%s0 + $0x3c] sm:$0xf]
  %v31 = vld [vmem:[%s1] sm:$0xf]
  %v32 = vld [vmem:[%s2] sm:$0x1]
  %v34 = vperm.slane %v32, 0
  %v52 = vunpack.c.l.b16 %v15
  %v53 = vunpack.c.l.b16 %v16
  %v54 = vunpack.c.l.b16 %v17
  %v55 = vunpack.c.l.b16 %v18
  %v56 = vunpack.c.l.b16 %v19
  %v57 = vunpack.c.l.b16 %v20
  %v58 = vunpack.c.l.b16 %v21
  %v59 = vunpack.c.l.b16 %v22
  %v60 = vunpack.c.l.b16 %v23
  %v61 = vunpack.c.l.b16 %v24
  %v62 = vunpack.c.l.b16 %v25
  %v63 = vunpack.c.l.b16 %v26
  %v64 = vunpack.c.l.b16 %v27
  %v65 = vunpack.c.l.b16 %v28
  %v66 = vunpack.c.l.b16 %v29
  %v67 = vunpack.c.l.b16 %v30
  %v68 = vpack.c.b16 %v53, %v52
  %v69 = vpack.c.b16 %v55, %v54
  %v70 = vpack.c.b16 %v57, %v56
  %v71 = vpack.c.b16 %v59, %v58
  %v72 = vpack.c.b16 %v61, %v60
  %v73 = vpack.c.b16 %v63, %v62
  %v74 = vpack.c.b16 %v65, %v64
  %v75 = vpack.c.b16 %v67, %v66
  %vm76 = vcmask 64512
  %v78 = vsel %vm76, %v68, 0
  %v81 = vsel %vm76, %v69, 0
  %v84 = vsel %vm76, %v70, 0
  %v87 = vsel %vm76, %v71, 0
  %v90 = vsel %vm76, %v72, 0
  %v93 = vsel %vm76, %v73, 0
  %v96 = vsel %vm76, %v74, 0
  %v99 = vsel %vm76, %v75, 0
  %vm101 = vcmask 1043456
  %v103 = vsel %vm101, %v31, 0
  %105 = vmatpush.bf16.msra.mxu0 0
  %106 = vmatpush.bf16.msra.mxu0 0
  %107 = vmatpush.bf16.msra.mxu0 0
  %108 = vmatpush.bf16.msra.mxu0 0
  %109 = vmatpush.bf16.msra.mxu0 0
  %110 = vmatpush.bf16.msra.mxu0 0
  %111 = vmatpush.bf16.msra.mxu0 0
  %112 = vmatpush.bf16.msra.mxu0 %v103
  %113 = vmatmul.bf16.gmra.mxu0 %v78
  %v114 = vpop.f32.mrf.mxu0
  %v115 = vadd.f32 %v34, %v114
  %v116 = vpop.f32.mrf.mxu0
  %v117 = vadd.f32 %v34, %v116
  %118 = vmatmul.bf16.gmra.mxu0 %v81
  %v119 = vpop.f32.mrf.mxu0
  %v120 = vadd.f32 %v34, %v119
  %v121 = vpop.f32.mrf.mxu0
  %v122 = vadd.f32 %v34, %v121
  %123 = vmatmul.bf16.gmra.mxu0 %v84
  %v124 = vpop.f32.mrf.mxu0
  %v125 = vadd.f32 %v34, %v124
  %v126 = vpop.f32.mrf.mxu0
  %v127 = vadd.f32 %v34, %v126
  %128 = vmatmul.bf16.gmra.mxu0 %v87
  %v129 = vpop.f32.mrf.mxu0
  %v130 = vadd.f32 %v34, %v129
  %v131 = vpop.f32.mrf.mxu0
  %v132 = vadd.f32 %v34, %v131
  %133 = vmatmul.bf16.gmra.mxu0 %v90
  %v134 = vpop.f32.mrf.mxu0
  %v135 = vadd.f32 %v34, %v134
  %v136 = vpop.f32.mrf.mxu0
  %v137 = vadd.f32 %v34, %v136
  %138 = vmatmul.bf16.gmra.mxu0 %v93
  %v139 = vpop.f32.mrf.mxu0
  %v140 = vadd.f32 %v34, %v139
  %v141 = vpop.f32.mrf.mxu0
  %v142 = vadd.f32 %v34, %v141
  %143 = vmatmul.bf16.gmra.mxu0 %v96
  %v144 = vpop.f32.mrf.mxu0
  %v145 = vadd.f32 %v34, %v144
  %v146 = vpop.f32.mrf.mxu0
  %v147 = vadd.f32 %v34, %v146
  %148 = vmatmul.bf16.gmra.mxu0 %v99
  %v149 = vpop.f32.mrf.mxu0
  %v150 = vadd.f32 %v34, %v149
  %v151 = vpop.f32.mrf.mxu0
  %v152 = vadd.f32 %v34, %v151
  %153 = vdwg.mxu0
  %v154 = vmax.f32 %v115, 0.0
  %v155 = vmax.f32 %v117, 0.0
  %v156 = vmax.f32 %v120, 0.0
  %v157 = vmax.f32 %v122, 0.0
  %v158 = vmax.f32 %v125, 0.0
  %v159 = vmax.f32 %v127, 0.0
  %v160 = vmax.f32 %v130, 0.0
  %v161 = vmax.f32 %v132, 0.0
  %v162 = vmax.f32 %v135, 0.0
  %v163 = vmax.f32 %v137, 0.0
  %v164 = vmax.f32 %v140, 0.0
  %v165 = vmax.f32 %v142, 0.0
  %v166 = vmax.f32 %v145, 0.0
  %v167 = vmax.f32 %v147, 0.0
  %v168 = vmax.f32 %v150, 0.0
  %v169 = vmax.f32 %v152, 0.0
  %v170 = vmin.f32 %v154, 6.0
  %v171 = vmin.f32 %v155, 6.0
  %v172 = vmin.f32 %v156, 6.0
  %v173 = vmin.f32 %v157, 6.0
  %v174 = vmin.f32 %v158, 6.0
  %v175 = vmin.f32 %v159, 6.0
  %v176 = vmin.f32 %v160, 6.0
  %v177 = vmin.f32 %v161, 6.0
  %v178 = vmin.f32 %v162, 6.0
  %v179 = vmin.f32 %v163, 6.0
  %v180 = vmin.f32 %v164, 6.0
  %v181 = vmin.f32 %v165, 6.0
  %v182 = vmin.f32 %v166, 6.0
  %v183 = vmin.f32 %v167, 6.0
  %v184 = vmin.f32 %v168, 6.0
  %v185 = vmin.f32 %v169, 6.0
  %v186 = vpack.c.bf16 %v170, %v170
  %v187 = vpack.c.bf16 %v171, %v171
  %v188 = vpack.c.bf16 %v172, %v172
  %v189 = vpack.c.bf16 %v173, %v173
  %v190 = vpack.c.bf16 %v174, %v174
  %v191 = vpack.c.bf16 %v175, %v175
  %v192 = vpack.c.bf16 %v176, %v176
  %v193 = vpack.c.bf16 %v177, %v177
  %v194 = vpack.c.bf16 %v178, %v178
  %v195 = vpack.c.bf16 %v179, %v179
  %v196 = vpack.c.bf16 %v180, %v180
  %v197 = vpack.c.bf16 %v181, %v181
  %v198 = vpack.c.bf16 %v182, %v182
  %v199 = vpack.c.bf16 %v183, %v183
  %v200 = vpack.c.bf16 %v184, %v184
  %v201 = vpack.c.bf16 %v185, %v185
  %vm202 = vcmask 125952
  %203 = vst.msk [vmem:[%s3] sm:$0xf] %vm202, %v186
  %204 = vst.msk [vmem:[%s3 + $0x4] sm:$0xf] %vm202, %v187
  %205 = vst.msk [vmem:[%s3 + $0x8] sm:$0xf] %vm202, %v188
  %206 = vst.msk [vmem:[%s3 + $0xc] sm:$0xf] %vm202, %v189
  %207 = vst.msk [vmem:[%s3 + $0x10] sm:$0xf] %vm202, %v190
  %208 = vst.msk [vmem:[%s3 + $0x14] sm:$0xf] %vm202, %v191
  %209 = vst.msk [vmem:[%s3 + $0x18] sm:$0xf] %vm202, %v192
  %210 = vst.msk [vmem:[%s3 + $0x1c] sm:$0xf] %vm202, %v193
  %211 = vst.msk [vmem:[%s3 + $0x20] sm:$0xf] %vm202, %v194
  %212 = vst.msk [vmem:[%s3 + $0x24] sm:$0xf] %vm202, %v195
  %213 = vst.msk [vmem:[%s3 + $0x28] sm:$0xf] %vm202, %v196
  %214 = vst.msk [vmem:[%s3 + $0x2c] sm:$0xf] %vm202, %v197
  %215 = vst.msk [vmem:[%s3 + $0x30] sm:$0xf] %vm202, %v198
  %216 = vst.msk [vmem:[%s3 + $0x34] sm:$0xf] %vm202, %v199
  %217 = vst.msk [vmem:[%s3 + $0x38] sm:$0xf] %vm202, %v200
  %218 = vst.msk [vmem:[%s3 + $0x3c] sm:$0xf] %vm202, %v201
  // Predicated region
  $region14: #{ssd_model.13} parent=0 // pred_check
    _
  $region15: #{ssd_model.13} parent=0 // pred_check_branch
    %220 = sbr.rel (0) target = $region17
  $region16: #{ssd_model.13} parent=0 // pred_region
    _
  $region17: #{ssd_model.13} parent=0 // pred_fallthru
    _
  // Predicated region
  $region18: #{ssd_model.13} parent=0 // pred_check
    _
  $region19: #{ssd_model.13} parent=0 // pred_check_branch
    %222 = sbr.rel (0) target = $region21
  $region20: #{ssd_model.13} parent=0 // pred_region
    _
  $region21: #{ssd_model.13} parent=0 // pred_fallthru
    _

// kernel: ssd_model.12
$region0: #{ssd_model.12}
  #allocation0 [shape = 'u32[]', space=smem, size = 0x4, offset = 0x4, fixed_abs, tag = 'smem constant byte address 0x4 - core index']
  #allocation1 [shape = 'u32[72,128]{1,0:T(1,128)}', space=vmem, size = 0x9000, scoped, tag = 'internal scratch']
  %s0 = inlined_call_operand.vmem [shape: bf16[128,27], index: 0, kind: input, shape index: {}]
  %s1 = inlined_call_operand.vmem [shape: bf16[27,8], index: 1, kind: input, shape index: {}]
  %s2 = inlined_call_operand.vmem [shape: f32[1,8], index: 2, kind: input, shape index: {}]
  %s3 = inlined_call_operand.vmem [shape: bf16[128,8], index: 3, kind: output, shape index: {}]
  %s4 = sld [smem:[#allocation0]]
  $region22: #{ssd_model.12} parent=0
    _
  %s6 = ssub.s32 1, %s4
  %s7 = scalar_select 0, %s6, %s4
  // Predicated region
  $region2: #{ssd_model.12} parent=0 // pred_check
    _
  $region3: #{ssd_model.12} parent=0 // pred_check_branch
    %9 = sbr.rel (0) target = $region5
  $region4: #{ssd_model.12} parent=0 // pred_region
    _
  $region5: #{ssd_model.12} parent=0 // pred_fallthru
    _
  // Predicated region
  $region6: #{ssd_model.12} parent=0 // pred_check
    _
  $region7: #{ssd_model.12} parent=0 // pred_check_branch
    %11 = sbr.rel (0) target = $region9
  $region8: #{ssd_model.12} parent=0 // pred_region
    _
  $region9: #{ssd_model.12} parent=0 // pred_fallthru
    _
  // Predicated region
  $region10: #{ssd_model.12} parent=0 // pred_check
    _
  $region11: #{ssd_model.12} parent=0 // pred_check_branch
    %13 = sbr.rel (0) target = $region13
  $region12: #{ssd_model.12} parent=0 // pred_region
    _
  $region13: #{ssd_model.12} parent=0 // pred_fallthru
    _
  %v15 = vld [vmem:[%s0] sm:$0xf]
  %v16 = vld [vmem:[%s0 + $0x4] sm:$0xf]
  %v17 = vld [vmem:[%s0 + $0x8] sm:$0xf]
  %v18 = vld [vmem:[%s0 + $0xc] sm:$0xf]
  %v19 = vld [vmem:[%s0 + $0x10] sm:$0xf]
  %v20 = vld [vmem:[%s0 + $0x14] sm:$0xf]
  %v21 = vld [vmem:[%s0 + $0x18] sm:$0xf]
  %v22 = vld [vmem:[%s0 + $0x1c] sm:$0xf]
  %v23 = vld [vmem:[%s0 + $0x20] sm:$0xf]
  %v24 = vld [vmem:[%s0 + $0x24] sm:$0xf]
  %v25 = vld [vmem:[%s0 + $0x28] sm:$0xf]
  %v26 = vld [vmem:[%s0 + $0x2c] sm:$0xf]
  %v27 = vld [vmem:[%s0 + $0x30] sm:$0xf]
  %v28 = vld [vmem:[%s0 + $0x34] sm:$0xf]
  %v29 = vld [vmem:[%s0 + $0x38] sm:$0xf]
  %v30 = vld [vmem:[%s0 + $0x3c] sm:$0xf]
  %v31 = vld [vmem:[%s1] sm:$0xf]
  %v32 = vld [vmem:[%s1 + $0x4] sm:$0xf]
  %v33 = vld [vmem:[%s1 + $0x8] sm:$0xf]
  %v34 = vld [vmem:[%s1 + $0xc] sm:$0x3]
  %v35 = vld [vmem:[%s2] sm:$0x1]
  %v37 = vperm.slane %v35, 0
  %v55 = vunpack.c.l.b16 %v15
  %v56 = vunpack.c.l.b16 %v16
  %v57 = vunpack.c.l.b16 %v17
  %v58 = vunpack.c.l.b16 %v18
  %v59 = vunpack.c.l.b16 %v19
  %v60 = vunpack.c.l.b16 %v20
  %v61 = vunpack.c.l.b16 %v21
  %v62 = vunpack.c.l.b16 %v22
  %v63 = vunpack.c.l.b16 %v23
  %v64 = vunpack.c.l.b16 %v24
  %v65 = vunpack.c.l.b16 %v25
  %v66 = vunpack.c.l.b16 %v26
  %v67 = vunpack.c.l.b16 %v27
  %v68 = vunpack.c.l.b16 %v28
  %v69 = vunpack.c.l.b16 %v29
  %v70 = vunpack.c.l.b16 %v30
  %v71 = vpack.c.b16 %v56, %v55
  %v72 = vpack.c.b16 %v58, %v57
  %v73 = vpack.c.b16 %v60, %v59
  %v74 = vpack.c.b16 %v62, %v61
  %v75 = vpack.c.b16 %v64, %v63
  %v76 = vpack.c.b16 %v66, %v65
  %v77 = vpack.c.b16 %v68, %v67
  %v78 = vpack.c.b16 %v70, %v69
  %v83 = vunpack.c.l.b16 %v31
  %v84 = vunpack.c.l.b16 %v32
  %v85 = vunpack.c.l.b16 %v33
  %v86 = vunpack.c.l.b16 %v34
  %v87 = vpack.c.b16 %v84, %v83
  %v88 = vpack.c.b16 %v86, %v85
  %vm90 = vcmask 220160
  %v92 = vsel %vm90, %v71, 0
  %v95 = vsel %vm90, %v72, 0
  %v98 = vsel %vm90, %v73, 0
  %v101 = vsel %vm90, %v74, 0
  %v104 = vsel %vm90, %v75, 0
  %v107 = vsel %vm90, %v76, 0
  %v110 = vsel %vm90, %v77, 0
  %v113 = vsel %vm90, %v78, 0
  %vm115 = vcmask 1044480
  %vm116 = vcmask 1045504
  %v117 = vsel %vm115, 4294967295, 65535
  %v118 = vsel %vm116, %v117, 0
  %v120 = vand.u32 %v88, %v118
  %122 = vmatpush.bf16.msra.mxu0 0
  %123 = vmatpush.bf16.msra.mxu0 0
  %124 = vmatpush.bf16.msra.mxu0 0
  %125 = vmatpush.bf16.msra.mxu0 0
  %126 = vmatpush.bf16.msra.mxu0 0
  %127 = vmatpush.bf16.msra.mxu0 0
  %128 = vmatpush.bf16.msra.mxu0 %v120
  %129 = vmatpush.bf16.msra.mxu0 %v87
  %130 = vmatmul.bf16.gmra.mxu0 %v92
  %v131 = vpop.f32.mrf.mxu0
  %v132 = vadd.f32 %v37, %v131
  %v133 = vpop.f32.mrf.mxu0
  %v134 = vadd.f32 %v37, %v133
  %135 = vmatmul.bf16.gmra.mxu0 %v95
  %v136 = vpop.f32.mrf.mxu0
  %v137 = vadd.f32 %v37, %v136
  %v138 = vpop.f32.mrf.mxu0
  %v139 = vadd.f32 %v37, %v138
  %140 = vmatmul.bf16.gmra.mxu0 %v98
  %v141 = vpop.f32.mrf.mxu0
  %v142 = vadd.f32 %v37, %v141
  %v143 = vpop.f32.mrf.mxu0
  %v144 = vadd.f32 %v37, %v143
  %145 = vmatmul.bf16.gmra.mxu0 %v101
  %v146 = vpop.f32.mrf.mxu0
  %v147 = vadd.f32 %v37, %v146
  %v148 = vpop.f32.mrf.mxu0
  %v149 = vadd.f32 %v37, %v148
  %150 = vmatmul.bf16.gmra.mxu0 %v104
  %v151 = vpop.f32.mrf.mxu0
  %v152 = vadd.f32 %v37, %v151
  %v153 = vpop.f32.mrf.mxu0
  %v154 = vadd.f32 %v37, %v153
  %155 = vmatmul.bf16.gmra.mxu0 %v107
  %v156 = vpop.f32.mrf.mxu0
  %v157 = vadd.f32 %v37, %v156
  %v158 = vpop.f32.mrf.mxu0
  %v159 = vadd.f32 %v37, %v158
  %160 = vmatmul.bf16.gmra.mxu0 %v110
  %v161 = vpop.f32.mrf.mxu0
  %v162 = vadd.f32 %v37, %v161
  %v163 = vpop.f32.mrf.mxu0
  %v164 = vadd.f32 %v37, %v163
  %165 = vmatmul.bf16.gmra.mxu0 %v113
  %v166 = vpop.f32.mrf.mxu0
  %v167 = vadd.f32 %v37, %v166
  %v168 = vpop.f32.mrf.mxu0
  %v169 = vadd.f32 %v37, %v168
  %170 = vdwg.mxu0
  %v171 = vmax.f32 %v132, 0.0
  %v172 = vmax.f32 %v134, 0.0
  %v173 = vmax.f32 %v137, 0.0
  %v174 = vmax.f32 %v139, 0.0
  %v175 = vmax.f32 %v142, 0.0
  %v176 = vmax.f32 %v144, 0.0
  %v177 = vmax.f32 %v147, 0.0
  %v178 = vmax.f32 %v149, 0.0
  %v179 = vmax.f32 %v152, 0.0
  %v180 = vmax.f32 %v154, 0.0
  %v181 = vmax.f32 %v157, 0.0
  %v182 = vmax.f32 %v159, 0.0
  %v183 = vmax.f32 %v162, 0.0
  %v184 = vmax.f32 %v164, 0.0
  %v185 = vmax.f32 %v167, 0.0
  %v186 = vmax.f32 %v169, 0.0
  %v187 = vmin.f32 %v171, 6.0
  %v188 = vmin.f32 %v172, 6.0
  %v189 = vmin.f32 %v173, 6.0
  %v190 = vmin.f32 %v174, 6.0
  %v191 = vmin.f32 %v175, 6.0
  %v192 = vmin.f32 %v176, 6.0
  %v193 = vmin.f32 %v177, 6.0
  %v194 = vmin.f32 %v178, 6.0
  %v195 = vmin.f32 %v179, 6.0
  %v196 = vmin.f32 %v180, 6.0
  %v197 = vmin.f32 %v181, 6.0
  %v198 = vmin.f32 %v182, 6.0
  %v199 = vmin.f32 %v183, 6.0
  %v200 = vmin.f32 %v184, 6.0
  %v201 = vmin.f32 %v185, 6.0
  %v202 = vmin.f32 %v186, 6.0
  %v203 = vpack.c.bf16 %v187, %v187
  %v204 = vpack.c.bf16 %v188, %v188
  %v205 = vpack.c.bf16 %v189, %v189
  %v206 = vpack.c.bf16 %v190, %v190
  %v207 = vpack.c.bf16 %v191, %v191
  %v208 = vpack.c.bf16 %v192, %v192
  %v209 = vpack.c.bf16 %v193, %v193
  %v210 = vpack.c.bf16 %v194, %v194
  %v211 = vpack.c.bf16 %v195, %v195
  %v212 = vpack.c.bf16 %v196, %v196
  %v213 = vpack.c.bf16 %v197, %v197
  %v214 = vpack.c.bf16 %v198, %v198
  %v215 = vpack.c.bf16 %v199, %v199
  %v216 = vpack.c.bf16 %v200, %v200
  %v217 = vpack.c.bf16 %v201, %v201
  %v218 = vpack.c.bf16 %v202, %v202
  %vm219 = vcmask 60416
  %220 = vst.msk [vmem:[%s3] sm:$0xf] %vm219, %v203
  %221 = vst.msk [vmem:[%s3 + $0x4] sm:$0xf] %vm219, %v204
  %222 = vst.msk [vmem:[%s3 + $0x8] sm:$0xf] %vm219, %v205
  %223 = vst.msk [vmem:[%s3 + $0xc] sm:$0xf] %vm219, %v206
  %224 = vst.msk [vmem:[%s3 + $0x10] sm:$0xf] %vm219, %v207
  %225 = vst.msk [vmem:[%s3 + $0x14] sm:$0xf] %vm219, %v208
  %226 = vst.msk [vmem:[%s3 + $0x18] sm:$0xf] %vm219, %v209
  %227 = vst.msk [vmem:[%s3 + $0x1c] sm:$0xf] %vm219, %v210
  %228 = vst.msk [vmem:[%s3 + $0x20] sm:$0xf] %vm219, %v211
  %229 = vst.msk [vmem:[%s3 + $0x24] sm:$0xf] %vm219, %v212
  %230 = vst.msk [vmem:[%s3 + $0x28] sm:$0xf] %vm219, %v213
  %231 = vst.msk [vmem:[%s3 + $0x2c] sm:$0xf] %vm219, %v214
  %232 = vst.msk [vmem:[%s3 + $0x30] sm:$0xf] %vm219, %v215
  %233 = vst.msk [vmem:[%s3 + $0x34] sm:$0xf] %vm219, %v216
  %234 = vst.msk [vmem:[%s3 + $0x38] sm:$0xf] %vm219, %v217
  %235 = vst.msk [vmem:[%s3 + $0x3c] sm:$0xf] %vm219, %v218
  // Predicated region
  $region14: #{ssd_model.12} parent=0 // pred_check
    _
  $region15: #{ssd_model.12} parent=0 // pred_check_branch
    %237 = sbr.rel (0) target = $region17
  $region16: #{ssd_model.12} parent=0 // pred_region
    _
  $region17: #{ssd_model.12} parent=0 // pred_fallthru
    _
  // Predicated region
  $region18: #{ssd_model.12} parent=0 // pred_check
    _
  $region19: #{ssd_model.12} parent=0 // pred_check_branch
    %239 = sbr.rel (0) target = $region21
  $region20: #{ssd_model.12} parent=0 // pred_region
    _
  $region21: #{ssd_model.12} parent=0 // pred_fallthru
    _

// kernel: ssd_model.15
$region0: #{ssd_model.15}
  #allocation0 [shape = 'u32[]', space=smem, size = 0x4, offset = 0x4, fixed_abs, tag = 'smem constant byte address 0x4 - core index']
  #allocation1 [shape = 'u32[72,128]{1,0:T(1,128)}', space=vmem, size = 0x9000, scoped, tag = 'internal scratch']
  %s0 = inlined_call_operand.vmem [shape: bf16[32,16], index: 0, kind: input, shape index: {}]
  %s1 = inlined_call_operand.vmem [shape: bf16[16,8], index: 1, kind: input, shape index: {}]
  %s2 = inlined_call_operand.vmem [shape: f32[1,8], index: 2, kind: input, shape index: {}]
  %s3 = inlined_call_operand.vmem [shape: bf16[32,8], index: 3, kind: output, shape index: {}]
  %s4 = sld [smem:[#allocation0]]
  $region22: #{ssd_model.15} parent=0
    _
  %s6 = ssub.s32 1, %s4
  %s7 = scalar_select 0, %s6, %s4
  // Predicated region
  $region2: #{ssd_model.15} parent=0 // pred_check
    _
  $region3: #{ssd_model.15} parent=0 // pred_check_branch
    %9 = sbr.rel (0) target = $region5
  $region4: #{ssd_model.15} parent=0 // pred_region
    _
  $region5: #{ssd_model.15} parent=0 // pred_fallthru
    _
  // Predicated region
  $region6: #{ssd_model.15} parent=0 // pred_check
    _
  $region7: #{ssd_model.15} parent=0 // pred_check_branch
    %11 = sbr.rel (0) target = $region9
  $region8: #{ssd_model.15} parent=0 // pred_region
    _
  $region9: #{ssd_model.15} parent=0 // pred_fallthru
    _
  // Predicated region
  $region10: #{ssd_model.15} parent=0 // pred_check
    _
  $region11: #{ssd_model.15} parent=0 // pred_check_branch
    %13 = sbr.rel (0) target = $region13
  $region12: #{ssd_model.15} parent=0 // pred_region
    _
  $region13: #{ssd_model.15} parent=0 // pred_fallthru
    _
  %v15 = vld [vmem:[%s0] sm:$0xf]
  %v16 = vld [vmem:[%s0 + $0x4] sm:$0xf]
  %v17 = vld [vmem:[%s0 + $0x8] sm:$0xf]
  %v18 = vld [vmem:[%s0 + $0xc] sm:$0xf]
  %v19 = vld [vmem:[%s1] sm:$0xf]
  %v20 = vld [vmem:[%s1 + $0x4] sm:$0xf]
  %v21 = vld [vmem:[%s2] sm:$0x1]
  %v23 = vperm.slane %v21, 0
  %v29 = vunpack.c.l.b16 %v15
  %v30 = vunpack.c.l.b16 %v16
  %v31 = vunpack.c.l.b16 %v17
  %v32 = vunpack.c.l.b16 %v18
  %v33 = vpack.c.b16 %v30, %v29
  %v34 = vpack.c.b16 %v32, %v31
  %v37 = vunpack.c.l.b16 %v19
  %v38 = vunpack.c.l.b16 %v20
  %v39 = vpack.c.b16 %v38, %v37
  %vm41 = vcmask 130048
  %v43 = vsel %vm41, %v33, 0
  %v46 = vsel %vm41, %v34, 0
  %48 = vmatpush.bf16.msra.mxu0 0
  %49 = vmatpush.bf16.msra.mxu0 0
  %50 = vmatpush.bf16.msra.mxu0 0
  %51 = vmatpush.bf16.msra.mxu0 0
  %52 = vmatpush.bf16.msra.mxu0 0
  %53 = vmatpush.bf16.msra.mxu0 0
  %54 = vmatpush.bf16.msra.mxu0 0
  %55 = vmatpush.bf16.msra.mxu0 %v39
  %56 = vmatmul.bf16.gmra.mxu0 %v43
  %v57 = vpop.f32.mrf.mxu0
  %v58 = vadd.f32 %v23, %v57
  %v59 = vpop.f32.mrf.mxu0
  %v60 = vadd.f32 %v23, %v59
  %61 = vmatmul.bf16.gmra.mxu0 %v46
  %v62 = vpop.f32.mrf.mxu0
  %v63 = vadd.f32 %v23, %v62
  %v64 = vpop.f32.mrf.mxu0
  %v65 = vadd.f32 %v23, %v64
  %66 = vdwg.mxu0
  %v67 = vmax.f32 %v58, 0.0
  %v68 = vmax.f32 %v60, 0.0
  %v69 = vmax.f32 %v63, 0.0
  %v70 = vmax.f32 %v65, 0.0
  %v71 = vmin.f32 %v67, 6.0
  %v72 = vmin.f32 %v68, 6.0
  %v73 = vmin.f32 %v69, 6.0
  %v74 = vmin.f32 %v70, 6.0
  %v75 = vpack.c.bf16 %v71, %v71
  %v76 = vpack.c.bf16 %v72, %v72
  %v77 = vpack.c.bf16 %v73, %v73
  %v78 = vpack.c.bf16 %v74, %v74
  %vm79 = vcmask 60416
  %80 = vst.msk [vmem:[%s3] sm:$0xf] %vm79, %v75
  %81 = vst.msk [vmem:[%s3 + $0x4] sm:$0xf] %vm79, %v76
  %82 = vst.msk [vmem:[%s3 + $0x8] sm:$0xf] %vm79, %v77
  %83 = vst.msk [vmem:[%s3 + $0xc] sm:$0xf] %vm79, %v78
  // Predicated region
  $region14: #{ssd_model.15} parent=0 // pred_check
    _
  $region15: #{ssd_model.15} parent=0 // pred_check_branch
    %85 = sbr.rel (0) target = $region17
  $region16: #{ssd_model.15} parent=0 // pred_region
    _
  $region17: #{ssd_model.15} parent=0 // pred_fallthru
    _
  // Predicated region
  $region18: #{ssd_model.15} parent=0 // pred_check
    _
  $region19: #{ssd_model.15} parent=0 // pred_check_branch
    %87 = sbr.rel (0) target = $region21
  $region20: #{ssd_model.15} parent=0 // pred_region
    _
  $region21: #{ssd_model.15} parent=0 // pred_fallthru
    _

// kernel: ssd_model.14
$region0: #{ssd_model.14}
  #allocation0 [shape = 'u32[]', space=smem, size = 0x4, offset = 0x4, fixed_abs, tag = 'smem constant byte address 0x4 - core index']
  #allocation1 [shape = 'u32[72,128]{1,0:T(1,128)}', space=vmem, size = 0x9000, scoped, tag = 'internal scratch']
  %s0 = inlined_call_operand.vmem [shape: bf16[32,144], index: 0, kind: input, shape index: {}]
  %s1 = inlined_call_operand.vmem [shape: bf16[144,16], index: 1, kind: input, shape index: {}]
  %s2 = inlined_call_operand.vmem [shape: f32[1,16], index: 2, kind: input, shape index: {}]
  %s3 = inlined_call_operand.vmem [shape: bf16[32,16], index: 3, kind: output, shape index: {}]
  %s4 = sld [smem:[#allocation0]]
  $region22: #{ssd_model.14} parent=0
    _
  %s6 = ssub.s32 1, %s4
  %s7 = scalar_select 0, %s6, %s4
  // Predicated region
  $region2: #{ssd_model.14} parent=0 // pred_check
    _
  $region3: #{ssd_model.14} parent=0 // pred_check_branch
    %9 = sbr.rel (0) target = $region5
  $region4: #{ssd_model.14} parent=0 // pred_region
    _
  $region5: #{ssd_model.14} parent=0 // pred_fallthru
    _
  // Predicated region
  $region6: #{ssd_model.14} parent=0 // pred_check
    _
  $region7: #{ssd_model.14} parent=0 // pred_check_branch
    %11 = sbr.rel (0) target = $region9
  $region8: #{ssd_model.14} parent=0 // pred_region
    _
  $region9: #{ssd_model.14} parent=0 // pred_fallthru
    _
  // Predicated region
  $region10: #{ssd_model.14} parent=0 // pred_check
    _
  $region11: #{ssd_model.14} parent=0 // pred_check_branch
    %13 = sbr.rel (0) target = $region13
  $region12: #{ssd_model.14} parent=0 // pred_region
    _
  $region13: #{ssd_model.14} parent=0 // pred_fallthru
    _
  %v15 = vld [vmem:[%s0] sm:$0xff]
  %v16 = vld [vmem:[%s0 + $0x8] sm:$0xff]
  %v17 = vld [vmem:[%s0 + $0x10] sm:$0xff]
  %v18 = vld [vmem:[%s0 + $0x18] sm:$0xff]
  %v19 = vld [vmem:[%s1] sm:$0xf]
  %v20 = vld [vmem:[%s1 + $0x4] sm:$0xf]
  %v21 = vld [vmem:[%s1 + $0x8] sm:$0xf]
  %v22 = vld [vmem:[%s1 + $0xc] sm:$0xf]
  %v23 = vld [vmem:[%s1 + $0x10] sm:$0xf]
  %v24 = vld [vmem:[%s1 + $0x14] sm:$0xf]
  %v25 = vld [vmem:[%s1 + $0x18] sm:$0xf]
  %v26 = vld [vmem:[%s1 + $0x1c] sm:$0xf]
  %v27 = vld [vmem:[%s1 + $0x20] sm:$0xf]
  %v28 = vld [vmem:[%s1 + $0x24] sm:$0xf]
  %v29 = vld [vmem:[%s1 + $0x28] sm:$0xf]
  %v30 = vld [vmem:[%s1 + $0x2c] sm:$0xf]
  %v31 = vld [vmem:[%s1 + $0x30] sm:$0xf]
  %v32 = vld [vmem:[%s1 + $0x34] sm:$0xf]
  %v33 = vld [vmem:[%s1 + $0x38] sm:$0xf]
  %v34 = vld [vmem:[%s1 + $0x3c] sm:$0xf]
  %v35 = vld [vmem:[%s1 + $0x40] sm:$0xf]
  %v36 = vld [vmem:[%s1 + $0x44] sm:$0xf]
  %v37 = vld [vmem:[%s2] sm:$0x1]
  %v39 = vperm.slane %v37, 0
  %v45 = vunpack.c.l.b16 %v15
  %v46 = vunpack.c.h.b16 %v15
  %v47 = vunpack.c.l.b16 %v16
  %v48 = vunpack.c.h.b16 %v16
  %v49 = vunpack.c.l.b16 %v17
  %v50 = vunpack.c.h.b16 %v17
  %v51 = vunpack.c.l.b16 %v18
  %v52 = vunpack.c.h.b16 %v18
  %v53 = vpack.c.b16 %v47, %v45
  %v54 = vpack.c.b16 %v48, %v46
  %v55 = vpack.c.b16 %v51, %v49
  %v56 = vpack.c.b16 %v52, %v50
  %v77 = vunpack.c.l.b16 %v19
  %v78 = vunpack.c.l.b16 %v20
  %v79 = vunpack.c.l.b16 %v21
  %v80 = vunpack.c.l.b16 %v22
  %v81 = vunpack.c.l.b16 %v23
  %v82 = vunpack.c.l.b16 %v24
  %v83 = vunpack.c.l.b16 %v25
  %v84 = vunpack.c.l.b16 %v26
  %v85 = vunpack.c.l.b16 %v27
  %v86 = vunpack.c.l.b16 %v28
  %v87 = vunpack.c.l.b16 %v29
  %v88 = vunpack.c.l.b16 %v30
  %v89 = vunpack.c.l.b16 %v31
  %v90 = vunpack.c.l.b16 %v32
  %v91 = vunpack.c.l.b16 %v33
  %v92 = vunpack.c.l.b16 %v34
  %v93 = vunpack.c.l.b16 %v35
  %v94 = vunpack.c.l.b16 %v36
  %v95 = vpack.c.b16 %v78, %v77
  %v96 = vpack.c.b16 %v80, %v79
  %v97 = vpack.c.b16 %v82, %v81
  %v98 = vpack.c.b16 %v84, %v83
  %v99 = vpack.c.b16 %v86, %v85
  %v100 = vpack.c.b16 %v88, %v87
  %v101 = vpack.c.b16 %v90, %v89
  %v102 = vpack.c.b16 %v92, %v91
  %v103 = vpack.c.b16 %v94, %v93
  %vm113 = vcmask 130048
  %v115 = vsel %vm113, %v54, 0
  %v118 = vsel %vm113, %v56, 0
  %120 = vmatpush.bf16.msra.mxu0 %v102
  %121 = vmatpush.bf16.msra.mxu0 %v101
  %122 = vmatpush.bf16.msra.mxu0 %v100
  %123 = vmatpush.bf16.msra.mxu0 %v99
  %124 = vmatpush.bf16.msra.mxu0 %v98
  %125 = vmatpush.bf16.msra.mxu0 %v97
  %126 = vmatpush.bf16.msra.mxu0 %v96
  %127 = vmatpush.bf16.msra.mxu0 %v95
  %128 = vmatmul.bf16.gmra.mxu0 %v53
  %v129 = vpop.f32.mrf.mxu0
  %v130 = vadd.f32 %v39, %v129
  %v131 = vpop.f32.mrf.mxu0
  %v132 = vadd.f32 %v39, %v131
  %133 = vmatmul.bf16.gmra.mxu0 %v55
  %v134 = vpop.f32.mrf.mxu0
  %v135 = vadd.f32 %v39, %v134
  %v136 = vpop.f32.mrf.mxu0
  %v137 = vadd.f32 %v39, %v136
  %138 = vdwg.mxu0
  %139 = vmatpush.bf16.msra.mxu0 0
  %140 = vmatpush.bf16.msra.mxu0 0
  %141 = vmatpush.bf16.msra.mxu0 0
  %142 = vmatpush.bf16.msra.mxu0 0
  %143 = vmatpush.bf16.msra.mxu0 0
  %144 = vmatpush.bf16.msra.mxu0 0
  %145 = vmatpush.bf16.msra.mxu0 0
  %146 = vmatpush.bf16.msra.mxu0 %v103
  %147 = vmatmul.bf16.gmra.mxu0 %v115
  %v148 = vpop.f32.mrf.mxu0
  %v149 = vadd.f32 %v130, %v148
  %v150 = vpop.f32.mrf.mxu0
  %v151 = vadd.f32 %v132, %v150
  %152 = vmatmul.bf16.gmra.mxu0 %v118
  %v153 = vpop.f32.mrf.mxu0
  %v154 = vadd.f32 %v135, %v153
  %v155 = vpop.f32.mrf.mxu0
  %v156 = vadd.f32 %v137, %v155
  %157 = vdwg.mxu0
  %v158 = vmax.f32 %v149, 0.0
  %v159 = vmax.f32 %v151, 0.0
  %v160 = vmax.f32 %v154, 0.0
  %v161 = vmax.f32 %v156, 0.0
  %v162 = vmin.f32 %v158, 6.0
  %v163 = vmin.f32 %v159, 6.0
  %v164 = vmin.f32 %v160, 6.0
  %v165 = vmin.f32 %v161, 6.0
  %v166 = vpack.c.bf16 %v162, %v162
  %v167 = vpack.c.bf16 %v163, %v163
  %v168 = vpack.c.bf16 %v164, %v164
  %v169 = vpack.c.bf16 %v165, %v165
  %vm170 = vcmask 125952
  %171 = vst.msk [vmem:[%s3] sm:$0xf] %vm170, %v166
  %172 = vst.msk [vmem:[%s3 + $0x4] sm:$0xf] %vm170, %v167
  %173 = vst.msk [vmem:[%s3 + $0x8] sm:$0xf] %vm170, %v168
  %174 = vst.msk [vmem:[%s3 + $0xc] sm:$0xf] %vm170, %v169
  // Predicated region
  $region14: #{ssd_model.14} parent=0 // pred_check
    _
  $region15: #{ssd_model.14} parent=0 // pred_check_branch
    %176 = sbr.rel (0) target = $region17
  $region16: #{ssd_model.14} parent=0 // pred_region
    _
  $region17: #{ssd_model.14} parent=0 // pred_fallthru
    _
  // Predicated region
  $region18: #{ssd_model.14} parent=0 // pred_check
    _
  $region19: #{ssd_model.14} parent=0 // pred_check_branch
    %178 = sbr.rel (0) target = $region21
  $region20: #{ssd_model.14} parent=0 // pred_region
    _
  $region21: #{ssd_model.14} parent=0 // pred_fallthru
    _

// kernel: ssd_model.17
$region0: #{ssd_model.17}
  #allocation0 [shape = 'u32[]', space=smem, size = 0x4, offset = 0x4, fixed_abs, tag = 'smem constant byte address 0x4 - core index']
  #allocation1 [shape = 'u32[72,128]{1,0:T(1,128)}', space=vmem, size = 0x9000, scoped, tag = 'internal scratch']
  %s0 = inlined_call_operand.vmem [shape: bf16[8,16], index: 0, kind: input, shape index: {}]
  %s1 = inlined_call_operand.vmem [shape: bf16[16,8], index: 1, kind: input, shape index: {}]
  %s2 = inlined_call_operand.vmem [shape: f32[1,8], index: 2, kind: input, shape index: {}]
  %s3 = inlined_call_operand.vmem [shape: bf16[8,8], index: 3, kind: output, shape index: {}]
  %s4 = sld [smem:[#allocation0]]
  $region22: #{ssd_model.17} parent=0
    _
  %s6 = ssub.s32 1, %s4
  %s7 = scalar_select 0, %s6, %s4
  // Predicated region
  $region2: #{ssd_model.17} parent=0 // pred_check
    _
  $region3: #{ssd_model.17} parent=0 // pred_check_branch
    %9 = sbr.rel (0) target = $region5
  $region4: #{ssd_model.17} parent=0 // pred_region
    _
  $region5: #{ssd_model.17} parent=0 // pred_fallthru
    _
  // Predicated region
  $region6: #{ssd_model.17} parent=0 // pred_check
    _
  $region7: #{ssd_model.17} parent=0 // pred_check_branch
    %11 = sbr.rel (0) target = $region9
  $region8: #{ssd_model.17} parent=0 // pred_region
    _
  $region9: #{ssd_model.17} parent=0 // pred_fallthru
    _
  // Predicated region
  $region10: #{ssd_model.17} parent=0 // pred_check
    _
  $region11: #{ssd_model.17} parent=0 // pred_check_branch
    %13 = sbr.rel (0) target = $region13
  $region12: #{ssd_model.17} parent=0 // pred_region
    _
  $region13: #{ssd_model.17} parent=0 // pred_fallthru
    _
  %v15 = vld [vmem:[%s0] sm:$0xf]
  %v16 = vld [vmem:[%s1] sm:$0xf]
  %v17 = vld [vmem:[%s1 + $0x4] sm:$0xf]
  %v18 = vld [vmem:[%s2] sm:$0x1]
  %v20 = vperm.slane %v18, 0
  %v24 = vunpack.c.l.b16 %v16
  %v25 = vunpack.c.l.b16 %v17
  %v26 = vpack.c.b16 %v25, %v24
  %vm28 = vcmask 130048
  %v30 = vsel %vm28, %v15, 0
  %32 = vmatpush.bf16.msra.mxu0 0
  %33 = vmatpush.bf16.msra.mxu0 0
  %34 = vmatpush.bf16.msra.mxu0 0
  %35 = vmatpush.bf16.msra.mxu0 0
  %36 = vmatpush.bf16.msra.mxu0 0
  %37 = vmatpush.bf16.msra.mxu0 0
  %38 = vmatpush.bf16.msra.mxu0 0
  %39 = vmatpush.bf16.msra.mxu0 %v26
  %40 = vmatmul.bf16.gmra.mxu0 %v30
  %v41 = vpop.f32.mrf.mxu0
  %v42 = vadd.f32 %v20, %v41
  %v43 = vpop.f32.mrf.mxu0
  %44 = vdwg.mxu0
  %v45 = vmax.f32 %v42, 0.0
  %v46 = vmin.f32 %v45, 6.0
  %v47 = vpack.c.bf16 %v46, %v46
  %vm48 = vcmask 60416
  %49 = vst.msk [vmem:[%s3] sm:$0xf] %vm48, %v47
  // Predicated region
  $region14: #{ssd_model.17} parent=0 // pred_check
    _
  $region15: #{ssd_model.17} parent=0 // pred_check_branch
    %51 = sbr.rel (0) target = $region17
  $region16: #{ssd_model.17} parent=0 // pred_region
    _
  $region17: #{ssd_model.17} parent=0 // pred_fallthru
    _
  // Predicated region
  $region18: #{ssd_model.17} parent=0 // pred_check
    _
  $region19: #{ssd_model.17} parent=0 // pred_check_branch
    %53 = sbr.rel (0) target = $region21
  $region20: #{ssd_model.17} parent=0 // pred_region
    _
  $region21: #{ssd_model.17} parent=0 // pred_fallthru
    _

// kernel: ssd_model.16
$region0: #{ssd_model.16}
  #allocation0 [shape = 'u32[]', space=smem, size = 0x4, offset = 0x4, fixed_abs, tag = 'smem constant byte address 0x4 - core index']
  #allocation1 [shape = 'u32[72,128]{1,0:T(1,128)}', space=vmem, size = 0x9000, scoped, tag = 'internal scratch']
  %s0 = inlined_call_operand.vmem [shape: bf16[8,72], index: 0, kind: input, shape index: {}]
  %s1 = inlined_call_operand.vmem [shape: bf16[72,16], index: 1, kind: input, shape index: {}]
  %s2 = inlined_call_operand.vmem [shape: f32[1,16], index: 2, kind: input, shape index: {}]
  %s3 = inlined_call_operand.vmem [shape: bf16[8,16], index: 3, kind: output, shape index: {}]
  %s4 = sld [smem:[#allocation0]]
  $region22: #{ssd_model.16} parent=0
    _
  %s6 = ssub.s32 1, %s4
  %s7 = scalar_select 0, %s6, %s4
  // Predicated region
  $region2: #{ssd_model.16} parent=0 // pred_check
    _
  $region3: #{ssd_model.16} parent=0 // pred_check_branch
    %9 = sbr.rel (0) target = $region5
  $region4: #{ssd_model.16} parent=0 // pred_region
    _
  $region5: #{ssd_model.16} parent=0 // pred_fallthru
    _
  // Predicated region
  $region6: #{ssd_model.16} parent=0 // pred_check
    _
  $region7: #{ssd_model.16} parent=0 // pred_check_branch
    %11 = sbr.rel (0) target = $region9
  $region8: #{ssd_model.16} parent=0 // pred_region
    _
  $region9: #{ssd_model.16} parent=0 // pred_fallthru
    _
  // Predicated region
  $region10: #{ssd_model.16} parent=0 // pred_check
    _
  $region11: #{ssd_model.16} parent=0 // pred_check_branch
    %13 = sbr.rel (0) target = $region13
  $region12: #{ssd_model.16} parent=0 // pred_region
    _
  $region13: #{ssd_model.16} parent=0 // pred_fallthru
    _
  %v15 = vld [vmem:[%s0] sm:$0xf]
  %v16 = vld [vmem:[%s1] sm:$0xf]
  %v17 = vld [vmem:[%s1 + $0x4] sm:$0xf]
  %v18 = vld [vmem:[%s1 + $0x8] sm:$0xf]
  %v19 = vld [vmem:[%s1 + $0xc] sm:$0xf]
  %v20 = vld [vmem:[%s1 + $0x10] sm:$0xf]
  %v21 = vld [vmem:[%s1 + $0x14] sm:$0xf]
  %v22 = vld [vmem:[%s1 + $0x18] sm:$0xf]
  %v23 = vld [vmem:[%s1 + $0x1c] sm:$0xf]
  %v24 = vld [vmem:[%s1 + $0x20] sm:$0xf]
  %v25 = vld [vmem:[%s2] sm:$0x1]
  %v27 = vperm.slane %v25, 0
  %v38 = vunpack.c.l.b16 %v16
  %v39 = vunpack.c.l.b16 %v17
  %v40 = vunpack.c.l.b16 %v18
  %v41 = vunpack.c.l.b16 %v19
  %v42 = vunpack.c.l.b16 %v20
  %v43 = vunpack.c.l.b16 %v21
  %v44 = vunpack.c.l.b16 %v22
  %v45 = vunpack.c.l.b16 %v23
  %v46 = vunpack.c.l.b16 %v24
  %v47 = vpack.c.b16 %v39, %v38
  %v48 = vpack.c.b16 %v41, %v40
  %v49 = vpack.c.b16 %v43, %v42
  %v50 = vpack.c.b16 %v45, %v44
  %v51 = vpack.c.b16 %v46, %v46
  %vm56 = vcmask 588800
  %v58 = vsel %vm56, %v15, 0
  %vm60 = vcmask 1043456
  %v62 = vsel %vm60, %v51, 0
  %64 = vmatpush.bf16.msra.mxu0 0
  %65 = vmatpush.bf16.msra.mxu0 0
  %66 = vmatpush.bf16.msra.mxu0 0
  %67 = vmatpush.bf16.msra.mxu0 %v62
  %68 = vmatpush.bf16.msra.mxu0 %v50
  %69 = vmatpush.bf16.msra.mxu0 %v49
  %70 = vmatpush.bf16.msra.mxu0 %v48
  %71 = vmatpush.bf16.msra.mxu0 %v47
  %72 = vmatmul.bf16.gmra.mxu0 %v58
  %v73 = vpop.f32.mrf.mxu0
  %v74 = vadd.f32 %v27, %v73
  %v75 = vpop.f32.mrf.mxu0
  %76 = vdwg.mxu0
  %v77 = vmax.f32 %v74, 0.0
  %v78 = vmin.f32 %v77, 6.0
  %v79 = vpack.c.bf16 %v78, %v78
  %vm80 = vcmask 125952
  %81 = vst.msk [vmem:[%s3] sm:$0xf] %vm80, %v79
  // Predicated region
  $region14: #{ssd_model.16} parent=0 // pred_check
    _
  $region15: #{ssd_model.16} parent=0 // pred_check_branch
    %83 = sbr.rel (0) target = $region17
  $region16: #{ssd_model.16} parent=0 // pred_region
    _
  $region17: #{ssd_model.16} parent=0 // pred_fallthru
    _
  // Predicated region
  $region18: #{ssd_model.16} parent=0 // pred_check
    _
  $region19: #{ssd_model.16} parent=0 // pred_check_branch
    %85 = sbr.rel (0) target = $region21
  $region20: #{ssd_model.16} parent=0 // pred_region
    _
  $region21: #{ssd_model.16} parent=0 // pred_fallthru
    _

// kernel: ssd_model.18
$region0: #{ssd_model.18}
  #allocation0 [shape = 'u32[]', space=smem, size = 0x4, offset = 0x4, fixed_abs, tag = 'smem constant byte address 0x4 - core index']
  #allocation1 [shape = 'u32[72,128]{1,0:T(1,128)}', space=vmem, size = 0x9000, scoped, tag = 'internal scratch']
  %s0 = inlined_call_operand.vmem [shape: bf16[2,72], index: 0, kind: input, shape index: {}]
  %s1 = inlined_call_operand.vmem [shape: bf16[72,16], index: 1, kind: input, shape index: {}]
  %s2 = inlined_call_operand.vmem [shape: f32[1,16], index: 2, kind: input, shape index: {}]
  %s3 = inlined_call_operand.vmem [shape: bf16[2,16], index: 3, kind: output, shape index: {}]
  %s4 = sld [smem:[#allocation0]]
  $region22: #{ssd_model.18} parent=0
    _
  %s6 = ssub.s32 1, %s4
  %s7 = scalar_select 0, %s6, %s4
  // Predicated region
  $region2: #{ssd_model.18} parent=0 // pred_check
    _
  $region3: #{ssd_model.18} parent=0 // pred_check_branch
    %9 = sbr.rel (0) target = $region5
  $region4: #{ssd_model.18} parent=0 // pred_region
    _
  $region5: #{ssd_model.18} parent=0 // pred_fallthru
    _
  // Predicated region
  $region6: #{ssd_model.18} parent=0 // pred_check
    _
  $region7: #{ssd_model.18} parent=0 // pred_check_branch
    %11 = sbr.rel (0) target = $region9
  $region8: #{ssd_model.18} parent=0 // pred_region
    _
  $region9: #{ssd_model.18} parent=0 // pred_fallthru
    _
  // Predicated region
  $region10: #{ssd_model.18} parent=0 // pred_check
    _
  $region11: #{ssd_model.18} parent=0 // pred_check_branch
    %13 = sbr.rel (0) target = $region13
  $region12: #{ssd_model.18} parent=0 // pred_region
    _
  $region13: #{ssd_model.18} parent=0 // pred_fallthru
    _
  %v15 = vld [vmem:[%s0] sm:$0x1]
  %v16 = vld [vmem:[%s1] sm:$0xf]
  %v17 = vld [vmem:[%s1 + $0x4] sm:$0xf]
  %v18 = vld [vmem:[%s1 + $0x8] sm:$0xf]
  %v19 = vld [vmem:[%s1 + $0xc] sm:$0xf]
  %v20 = vld [vmem:[%s1 + $0x10] sm:$0xf]
  %v21 = vld [vmem:[%s1 + $0x14] sm:$0xf]
  %v22 = vld [vmem:[%s1 + $0x18] sm:$0xf]
  %v23 = vld [vmem:[%s1 + $0x1c] sm:$0xf]
  %v24 = vld [vmem:[%s1 + $0x20] sm:$0xf]
  %v25 = vld [vmem:[%s2] sm:$0x1]
  %v27 = vperm.slane %v25, 0
  %v38 = vunpack.c.l.b16 %v16
  %v39 = vunpack.c.l.b16 %v17
  %v40 = vunpack.c.l.b16 %v18
  %v41 = vunpack.c.l.b16 %v19
  %v42 = vunpack.c.l.b16 %v20
  %v43 = vunpack.c.l.b16 %v21
  %v44 = vunpack.c.l.b16 %v22
  %v45 = vunpack.c.l.b16 %v23
  %v46 = vunpack.c.l.b16 %v24
  %v47 = vpack.c.b16 %v39, %v38
  %v48 = vpack.c.b16 %v41, %v40
  %v49 = vpack.c.b16 %v43, %v42
  %v50 = vpack.c.b16 %v45, %v44
  %v51 = vpack.c.b16 %v46, %v46
  %vm56 = vcmask 588800
  %v58 = vsel %vm56, %v15, 0
  %vm60 = vcmask 1043456
  %v62 = vsel %vm60, %v51, 0
  %64 = vmatpush.bf16.msra.mxu0 0
  %65 = vmatpush.bf16.msra.mxu0 0
  %66 = vmatpush.bf16.msra.mxu0 0
  %67 = vmatpush.bf16.msra.mxu0 %v62
  %68 = vmatpush.bf16.msra.mxu0 %v50
  %69 = vmatpush.bf16.msra.mxu0 %v49
  %70 = vmatpush.bf16.msra.mxu0 %v48
  %71 = vmatpush.bf16.msra.mxu0 %v47
  %72 = vmatmul.bf16.gmra.mxu0 %v58
  %v73 = vpop.f32.mrf.mxu0
  %v74 = vadd.f32 %v27, %v73
  %v75 = vpop.f32.mrf.mxu0
  %76 = vdwg.mxu0
  %v77 = vmax.f32 %v74, 0.0
  %v78 = vmin.f32 %v77, 6.0
  %v79 = vpack.c.bf16 %v78, %v78
  %vm80 = vcmask 122880
  %81 = vst.msk [vmem:[%s3] sm:$0x1] %vm80, %v79
  // Predicated region
  $region14: #{ssd_model.18} parent=0 // pred_check
    _
  $region15: #{ssd_model.18} parent=0 // pred_check_branch
    %83 = sbr.rel (0) target = $region17
  $region16: #{ssd_model.18} parent=0 // pred_region
    _
  $region17: #{ssd_model.18} parent=0 // pred_fallthru
    _
  // Predicated region
  $region18: #{ssd_model.18} parent=0 // pred_check
    _
  $region19: #{ssd_model.18} parent=0 // pred_check_branch
    %85 = sbr.rel (0) target = $region21
  $region20: #{ssd_model.18} parent=0 // pred_region
    _
  $region21: #{ssd_model.18} parent=0 // pred_fallthru
    _

// kernel: ssd_model.22
$region0: #{ssd_model.22}
  #allocation0 [shape = 'u32[]', space=smem, size = 0x4, offset = 0x4, fixed_abs, tag = 'smem constant byte address 0x4 - core index']
  #allocation1 [shape = 'u32[72,128]{1,0:T(1,128)}', space=vmem, size = 0x9000, scoped, tag = 'internal scratch']
  %s0 = inlined_call_operand.vmem [shape: bf16[2,16], index: 0, kind: input, shape index: {}]
  %s1 = inlined_call_operand.vmem [shape: bf16[16,24], index: 1, kind: input, shape index: {}]
  %s2 = inlined_call_operand.vmem [shape: f32[1,24], index: 2, kind: input, shape index: {}]
  %s3 = inlined_call_operand.vmem [shape: f32[2,24], index: 3, kind: output, shape index: {}]
  %s4 = sld [smem:[#allocation0]]
  $region22: #{ssd_model.22} parent=0
    _
  %s6 = ssub.s32 1, %s4
  %s7 = scalar_select 0, %s6, %s4
  // Predicated region
  $region2: #{ssd_model.22} parent=0 // pred_check
    _
  $region3: #{ssd_model.22} parent=0 // pred_check_branch
    %9 = sbr.rel (0) target = $region5
  $region4: #{ssd_model.22} parent=0 // pred_region
    _
  $region5: #{ssd_model.22} parent=0 // pred_fallthru
    _
  // Predicated region
  $region6: #{ssd_model.22} parent=0 // pred_check
    _
  $region7: #{ssd_model.22} parent=0 // pred_check_branch
    %11 = sbr.rel (0) target = $region9
  $region8: #{ssd_model.22} parent=0 // pred_region
    _
  $region9: #{ssd_model.22} parent=0 // pred_fallthru
    _
  // Predicated region
  $region10: #{ssd_model.22} parent=0 // pred_check
    _
  $region11: #{ssd_model.22} parent=0 // pred_check_branch
    %13 = sbr.rel (0) target = $region13
  $region12: #{ssd_model.22} parent=0 // pred_region
    _
  $region13: #{ssd_model.22} parent=0 // pred_fallthru
    _
  %v15 = vld [vmem:[%s0] sm:$0x1]
  %v16 = vld [vmem:[%s1] sm:$0xf]
  %v17 = vld [vmem:[%s1 + $0x4] sm:$0xf]
  %v18 = vld [vmem:[%s2] sm:$0x1]
  %v20 = vperm.slane %v18, 0
  %v24 = vunpack.c.l.b16 %v16
  %v25 = vunpack.c.l.b16 %v17
  %v26 = vpack.c.b16 %v25, %v24
  %vm28 = vcmask 130048
  %v30 = vsel %vm28, %v15, 0
  %32 = vmatpush.bf16.msra.mxu0 0
  %33 = vmatpush.bf16.msra.mxu0 0
  %34 = vmatpush.bf16.msra.mxu0 0
  %35 = vmatpush.bf16.msra.mxu0 0
  %36 = vmatpush.bf16.msra.mxu0 0
  %37 = vmatpush.bf16.msra.mxu0 0
  %38 = vmatpush.bf16.msra.mxu0 0
  %39 = vmatpush.bf16.msra.mxu0 %v26
  %40 = vmatmul.bf16.gmra.mxu0 %v30
  %v41 = vpop.f32.mrf.mxu0
  %v42 = vadd.f32 %v20, %v41
  %v43 = vpop.f32.mrf.mxu0
  %44 = vdwg.mxu0
  %v45 = vlaneseq
  %v46 = vand.u32 %v45, 127
  %vm47 = vcmp.lt.s32.totalorder %v46, 12
  %v48 = vxor.u32 %v42, 2147483648
  %v49 = vmul.f32 %v48, 1.442695
  %v50 = vpow.pop %v49
  %v51 = vadd.f32 %v50, 1.0
  %v52 = vrcp.pop %v51
  %v53 = vmul.f32 %v51, %v52
  %v54 = vsub.f32 1.0, %v53
  %v55 = vmul.f32 %v52, %v54
  %v56 = vadd.f32 %v52, %v55
  %vm57 = vweird.f32 %v51
  %vm58 = vweird.f32 %v52
  %vm59 = vmor %vm57, %vm58
  %v60 = vsel %vm59, %v52, %v56
  %v61 = vand.u32 2147483647, %v51
  %vm62 = vcmp.eq.f32.partialorder %v61, 8.507059e+37
  %v63 = vand.u32 %v51, 2147483648
  %v64 = vor.u32 1.1754944e-38, %v63
  %v65 = vsel %vm62, %v64, %v60
  %v66 = vmul.f32 1.0, %v65
  %v67 = vsel %vm47, %v66, %v42
  %vm68 = vcmask 189440
  %69 = vst.msk [vmem:[%s3] sm:$0x3] %vm68, %v67
  // Predicated region
  $region14: #{ssd_model.22} parent=0 // pred_check
    _
  $region15: #{ssd_model.22} parent=0 // pred_check_branch
    %71 = sbr.rel (0) target = $region17
  $region16: #{ssd_model.22} parent=0 // pred_region
    _
  $region17: #{ssd_model.22} parent=0 // pred_fallthru
    _
  // Predicated region
  $region18: #{ssd_model.22} parent=0 // pred_check
    _
  $region19: #{ssd_model.22} parent=0 // pred_check_branch
    %73 = sbr.rel (0) target = $region21
  $region20: #{ssd_model.22} parent=0 // pred_region
    _
  $region21: #{ssd_model.22} parent=0 // pred_fallthru
    _

// kernel: ssd_model.21
$region0: #{ssd_model.21}
  #allocation0 [shape = 'u32[]', space=smem, size = 0x4, offset = 0x4, fixed_abs, tag = 'smem constant byte address 0x4 - core index']
  #allocation1 [shape = 'u32[72,128]{1,0:T(1,128)}', space=vmem, size = 0x9000, scoped, tag = 'internal scratch']
  %s0 = inlined_call_operand.vmem [shape: bf16[8,16], index: 0, kind: input, shape index: {}]
  %s1 = inlined_call_operand.vmem [shape: bf16[16,24], index: 1, kind: input, shape index: {}]
  %s2 = inlined_call_operand.vmem [shape: f32[1,24], index: 2, kind: input, shape index: {}]
  %s3 = inlined_call_operand.vmem [shape: f32[8,24], index: 3, kind: output, shape index: {}]
  %s4 = sld [smem:[#allocation0]]
  $region22: #{ssd_model.21} parent=0
    _
  %s6 = ssub.s32 1, %s4
  %s7 = scalar_select 0, %s6, %s4
  // Predicated region
  $region2: #{ssd_model.21} parent=0 // pred_check
    _
  $region3: #{ssd_model.21} parent=0 // pred_check_branch
    %9 = sbr.rel (0) target = $region5
  $region4: #{ssd_model.21} parent=0 // pred_region
    _
  $region5: #{ssd_model.21} parent=0 // pred_fallthru
    _
  // Predicated region
  $region6: #{ssd_model.21} parent=0 // pred_check
    _
  $region7: #{ssd_model.21} parent=0 // pred_check_branch
    %11 = sbr.rel (0) target = $region9
  $region8: #{ssd_model.21} parent=0 // pred_region
    _
  $region9: #{ssd_model.21} parent=0 // pred_fallthru
    _
  // Predicated region
  $region10: #{ssd_model.21} parent=0 // pred_check
    _
  $region11: #{ssd_model.21} parent=0 // pred_check_branch
    %13 = sbr.rel (0) target = $region13
  $region12: #{ssd_model.21} parent=0 // pred_region
    _
  $region13: #{ssd_model.21} parent=0 // pred_fallthru
    _
  %v15 = vld [vmem:[%s0] sm:$0xf]
  %v16 = vld [vmem:[%s1] sm:$0xf]
  %v17 = vld [vmem:[%s1 + $0x4] sm:$0xf]
  %v18 = vld [vmem:[%s2] sm:$0x1]
  %v20 = vperm.slane %v18, 0
  %v24 = vunpack.c.l.b16 %v16
  %v25 = vunpack.c.l.b16 %v17
  %v26 = vpack.c.b16 %v25, %v24
  %vm28 = vcmask 130048
  %v30 = vsel %vm28, %v15, 0
  %32 = vmatpush.bf16.msra.mxu0 0
  %33 = vmatpush.bf16.msra.mxu0 0
  %34 = vmatpush.bf16.msra.mxu0 0
  %35 = vmatpush.bf16.msra.mxu0 0
  %36 = vmatpush.bf16.msra.mxu0 0
  %37 = vmatpush.bf16.msra.mxu0 0
  %38 = vmatpush.bf16.msra.mxu0 0
  %39 = vmatpush.bf16.msra.mxu0 %v26
  %40 = vmatmul.bf16.gmra.mxu0 %v30
  %v41 = vpop.f32.mrf.mxu0
  %v42 = vadd.f32 %v20, %v41
  %v43 = vpop.f32.mrf.mxu0
  %44 = vdwg.mxu0
  %v45 = vlaneseq
  %v46 = vand.u32 %v45, 127
  %vm47 = vcmp.lt.s32.totalorder %v46, 12
  %v48 = vxor.u32 %v42, 2147483648
  %v49 = vmul.f32 %v48, 1.442695
  %v50 = vpow.pop %v49
  %v51 = vadd.f32 %v50, 1.0
  %v52 = vrcp.pop %v51
  %v53 = vmul.f32 %v51, %v52
  %v54 = vsub.f32 1.0, %v53
  %v55 = vmul.f32 %v52, %v54
  %v56 = vadd.f32 %v52, %v55
  %vm57 = vweird.f32 %v51
  %vm58 = vweird.f32 %v52
  %vm59 = vmor %vm57, %vm58
  %v60 = vsel %vm59, %v52, %v56
  %v61 = vand.u32 2147483647, %v51
  %vm62 = vcmp.eq.f32.partialorder %v61, 8.507059e+37
  %v63 = vand.u32 %v51, 2147483648
  %v64 = vor.u32 1.1754944e-38, %v63
  %v65 = vsel %vm62, %v64, %v60
  %v66 = vmul.f32 1.0, %v65
  %v67 = vsel %vm47, %v66, %v42
  %vm68 = vcmask 195584
  %69 = vst.msk [vmem:[%s3] sm:$0xff] %vm68, %v67
  // Predicated region
  $region14: #{ssd_model.21} parent=0 // pred_check
    _
  $region15: #{ssd_model.21} parent=0 // pred_check_branch
    %71 = sbr.rel (0) target = $region17
  $region16: #{ssd_model.21} parent=0 // pred_region
    _
  $region17: #{ssd_model.21} parent=0 // pred_fallthru
    _
  // Predicated region
  $region18: #{ssd_model.21} parent=0 // pred_check
    _
  $region19: #{ssd_model.21} parent=0 // pred_check_branch
    %73 = sbr.rel (0) target = $region21
  $region20: #{ssd_model.21} parent=0 // pred_region
    _
  $region21: #{ssd_model.21} parent=0 // pred_fallthru
    _

// kernel: ssd_model.20
$region0: #{ssd_model.20}
  #allocation0 [shape = 'u32[]', space=smem, size = 0x4, offset = 0x4, fixed_abs, tag = 'smem constant byte address 0x4 - core index']
  #allocation1 [shape = 'u32[72,128]{1,0:T(1,128)}', space=vmem, size = 0x9000, scoped, tag = 'internal scratch']
  %s0 = inlined_call_operand.vmem [shape: bf16[32,16], index: 0, kind: input, shape index: {}]
  %s1 = inlined_call_operand.vmem [shape: bf16[16,24], index: 1, kind: input, shape index: {}]
  %s2 = inlined_call_operand.vmem [shape: f32[1,24], index: 2, kind: input, shape index: {}]
  %s3 = inlined_call_operand.vmem [shape: f32[32,24], index: 3, kind: output, shape index: {}]
  %s4 = sld [smem:[#allocation0]]
  $region22: #{ssd_model.20} parent=0
    _
  %s6 = ssub.s32 1, %s4
  %s7 = scalar_select 0, %s6, %s4
  // Predicated region
  $region2: #{ssd_model.20} parent=0 // pred_check
    _
  $region3: #{ssd_model.20} parent=0 // pred_check_branch
    %9 = sbr.rel (0) target = $region5
  $region4: #{ssd_model.20} parent=0 // pred_region
    _
  $region5: #{ssd_model.20} parent=0 // pred_fallthru
    _
  // Predicated region
  $region6: #{ssd_model.20} parent=0 // pred_check
    _
  $region7: #{ssd_model.20} parent=0 // pred_check_branch
    %11 = sbr.rel (0) target = $region9
  $region8: #{ssd_model.20} parent=0 // pred_region
    _
  $region9: #{ssd_model.20} parent=0 // pred_fallthru
    _
  // Predicated region
  $region10: #{ssd_model.20} parent=0 // pred_check
    _
  $region11: #{ssd_model.20} parent=0 // pred_check_branch
    %13 = sbr.rel (0) target = $region13
  $region12: #{ssd_model.20} parent=0 // pred_region
    _
  $region13: #{ssd_model.20} parent=0 // pred_fallthru
    _
  %v15 = vld [vmem:[%s0] sm:$0xf]
  %v16 = vld [vmem:[%s0 + $0x4] sm:$0xf]
  %v17 = vld [vmem:[%s0 + $0x8] sm:$0xf]
  %v18 = vld [vmem:[%s0 + $0xc] sm:$0xf]
  %v19 = vld [vmem:[%s1] sm:$0xf]
  %v20 = vld [vmem:[%s1 + $0x4] sm:$0xf]
  %v21 = vld [vmem:[%s2] sm:$0x1]
  %v23 = vperm.slane %v21, 0
  %v29 = vunpack.c.l.b16 %v15
  %v30 = vunpack.c.l.b16 %v16
  %v31 = vunpack.c.l.b16 %v17
  %v32 = vunpack.c.l.b16 %v18
  %v33 = vpack.c.b16 %v30, %v29
  %v34 = vpack.c.b16 %v32, %v31
  %v37 = vunpack.c.l.b16 %v19
  %v38 = vunpack.c.l.b16 %v20
  %v39 = vpack.c.b16 %v38, %v37
  %vm41 = vcmask 130048
  %v43 = vsel %vm41, %v33, 0
  %v46 = vsel %vm41, %v34, 0
  %48 = vmatpush.bf16.msra.mxu0 0
  %49 = vmatpush.bf16.msra.mxu0 0
  %50 = vmatpush.bf16.msra.mxu0 0
  %51 = vmatpush.bf16.msra.mxu0 0
  %52 = vmatpush.bf16.msra.mxu0 0
  %53 = vmatpush.bf16.msra.mxu0 0
  %54 = vmatpush.bf16.msra.mxu0 0
  %55 = vmatpush.bf16.msra.mxu0 %v39
  %56 = vmatmul.bf16.gmra.mxu0 %v43
  %v57 = vpop.f32.mrf.mxu0
  %v58 = vadd.f32 %v23, %v57
  %v59 = vpop.f32.mrf.mxu0
  %v60 = vadd.f32 %v23, %v59
  %61 = vmatmul.bf16.gmra.mxu0 %v46
  %v62 = vpop.f32.mrf.mxu0
  %v63 = vadd.f32 %v23, %v62
  %v64 = vpop.f32.mrf.mxu0
  %v65 = vadd.f32 %v23, %v64
  %66 = vdwg.mxu0
  %v67 = vlaneseq
  %v68 = vand.u32 %v67, 127
  %vm69 = vcmp.lt.s32.totalorder %v68, 12
  %v70 = vxor.u32 %v58, 2147483648
  %v71 = vxor.u32 %v60, 2147483648
  %v72 = vxor.u32 %v63, 2147483648
  %v73 = vxor.u32 %v65, 2147483648
  %v74 = vmul.f32 %v70, 1.442695
  %v75 = vpow.pop %v74
  %v76 = vmul.f32 %v71, 1.442695
  %v77 = vpow.pop %v76
  %v78 = vmul.f32 %v72, 1.442695
  %v79 = vpow.pop %v78
  %v80 = vmul.f32 %v73, 1.442695
  %v81 = vpow.pop %v80
  %v82 = vadd.f32 %v75, 1.0
  %v83 = vadd.f32 %v77, 1.0
  %v84 = vadd.f32 %v79, 1.0
  %v85 = vadd.f32 %v81, 1.0
  %v86 = vrcp.pop %v82
  %v87 = vmul.f32 %v82, %v86
  %v88 = vsub.f32 1.0, %v87
  %v89 = vmul.f32 %v86, %v88
  %v90 = vadd.f32 %v86, %v89
  %vm91 = vweird.f32 %v82
  %vm92 = vweird.f32 %v86
  %vm93 = vmor %vm91, %vm92
  %v94 = vsel %vm93, %v86, %v90
  %v95 = vand.u32 2147483647, %v82
  %vm96 = vcmp.eq.f32.partialorder %v95, 8.507059e+37
  %v97 = vand.u32 %v82, 2147483648
  %v98 = vor.u32 1.1754944e-38, %v97
  %v99 = vsel %vm96, %v98, %v94
  %v100 = vmul.f32 1.0, %v99
  %v101 = vrcp.pop %v83
  %v102 = vmul.f32 %v83, %v101
  %v103 = vsub.f32 1.0, %v102
  %v104 = vmul.f32 %v101, %v103
  %v105 = vadd.f32 %v101, %v104
  %vm106 = vweird.f32 %v83
  %vm107 = vweird.f32 %v101
  %vm108 = vmor %vm106, %vm107
  %v109 = vsel %vm108, %v101, %v105
  %v110 = vand.u32 2147483647, %v83
  %vm111 = vcmp.eq.f32.partialorder %v110, 8.507059e+37
  %v112 = vand.u32 %v83, 2147483648
  %v113 = vor.u32 1.1754944e-38, %v112
  %v114 = vsel %vm111, %v113, %v109
  %v115 = vmul.f32 1.0, %v114
  %v116 = vrcp.pop %v84
  %v117 = vmul.f32 %v84, %v116
  %v118 = vsub.f32 1.0, %v117
  %v119 = vmul.f32 %v116, %v118
  %v120 = vadd.f32 %v116, %v119
  %vm121 = vweird.f32 %v84
  %vm122 = vweird.f32 %v116
  %vm123 = vmor %vm121, %vm122
  %v124 = vsel %vm123, %v116, %v120
  %v125 = vand.u32 2147483647, %v84
  %vm126 = vcmp.eq.f32.partialorder %v125, 8.507059e+37
  %v127 = vand.u32 %v84, 2147483648
  %v128 = vor.u32 1.1754944e-38, %v127
  %v129 = vsel %vm126, %v128, %v124
  %v130 = vmul.f32 1.0, %v129
  %v131 = vrcp.pop %v85
  %v132 = vmul.f32 %v85, %v131
  %v133 = vsub.f32 1.0, %v132
  %v134 = vmul.f32 %v131, %v133
  %v135 = vadd.f32 %v131, %v134
  %vm136 = vweird.f32 %v85
  %vm137 = vweird.f32 %v131
  %vm138 = vmor %vm136, %vm137
  %v139 = vsel %vm138, %v131, %v135
  %v140 = vand.u32 2147483647, %v85
  %vm141 = vcmp.eq.f32.partialorder %v140, 8.507059e+37
  %v142 = vand.u32 %v85, 2147483648
  %v143 = vor.u32 1.1754944e-38, %v142
  %v144 = vsel %vm141, %v143, %v139
  %v145 = vmul.f32 1.0, %v144
  %v146 = vsel %vm69, %v100, %v58
  %v147 = vsel %vm69, %v115, %v60
  %v148 = vsel %vm69, %v130, %v63
  %v149 = vsel %vm69, %v145, %v65
  %vm150 = vcmask 195584
  %151 = vst.msk [vmem:[%s3] sm:$0xff] %vm150, %v146
  %152 = vst.msk [vmem:[%s3 + $0x8] sm:$0xff] %vm150, %v147
  %153 = vst.msk [vmem:[%s3 + $0x10] sm:$0xff] %vm150, %v148
  %154 = vst.msk [vmem:[%s3 + $0x18] sm:$0xff] %vm150, %v149
  // Predicated region
  $region14: #{ssd_model.20} parent=0 // pred_check
    _
  $region15: #{ssd_model.20} parent=0 // pred_check_branch
    %156 = sbr.rel (0) target = $region17
  $region16: #{ssd_model.20} parent=0 // pred_region
    _
  $region17: #{ssd_model.20} parent=0 // pred_fallthru
    _
  // Predicated region
  $region18: #{ssd_model.20} parent=0 // pred_check
    _
  $region19: #{ssd_model.20} parent=0 // pred_check_branch
    %158 = sbr.rel (0) target = $region21
  $region20: #{ssd_model.20} parent=0 // pred_region
    _
  $region21: #{ssd_model.20} parent=0 // pred_fallthru
    _

// kernel: tile.7
$region0: #{tile.7}
  %s0 = inlined_call_operand.vmem [shape: f32[4,2,255], index: 0, kind: input, shape index: {}]
  %s1 = inlined_call_operand.vmem [shape: f32[4,510], index: 1, kind: output, shape index: {}]
  $region1: #{tile.7} parent=0
    #allocation0 [shape = 'u8[16384]{0}', space=vmem, size = 0x4000, scoped, tag = 'scoped mem for output reshape']
    #allocation1 [shape = 'u8[32768]{0}', space=vmem, size = 0x8000, scoped, tag = 'scoped mem for input reshape']
    %s3 = ssub.s32 4, 1
    %s4 = scalar_lea.vmem %s0, 14
    %v5 = vld [vmem:[%s4] sm:%s3]
    %s6 = scalar_lea.vmem [#allocation1], 56
    %7 = vst [vmem:[%s6] sm:%s3] %v5
    %s8 = scalar_lea.vmem %s0, 12
    %v9 = vld [vmem:[%s8] sm:%s3]
    %s10 = scalar_lea.vmem [#allocation1], 48
    %11 = vst [vmem:[%s10] sm:%s3] %v9
    %s12 = scalar_lea.vmem %s0, 10
    %v13 = vld [vmem:[%s12] sm:%s3]
    %s14 = scalar_lea.vmem [#allocation1], 40
    %15 = vst [vmem:[%s14] sm:%s3] %v13
    %s16 = scalar_lea.vmem %s0, 8
    %v17 = vld [vmem:[%s16] sm:%s3]
    %s18 = scalar_lea.vmem [#allocation1], 32
    %19 = vst [vmem:[%s18] sm:%s3] %v17
    %s20 = scalar_lea.vmem %s0, 6
    %v21 = vld [vmem:[%s20] sm:%s3]
    %s22 = scalar_lea.vmem [#allocation1], 24
    %23 = vst [vmem:[%s22] sm:%s3] %v21
    %s24 = scalar_lea.vmem %s0, 4
    %v25 = vld [vmem:[%s24] sm:%s3]
    %s26 = scalar_lea.vmem [#allocation1], 16
    %27 = vst [vmem:[%s26] sm:%s3] %v25
    %s28 = scalar_lea.vmem %s0, 2
    %v29 = vld [vmem:[%s28] sm:%s3]
    %s30 = scalar_lea.vmem [#allocation1], 8
    %31 = vst [vmem:[%s30] sm:%s3] %v29
    %v32 = vld [vmem:[%s0] sm:%s3]
    %33 = vst [vmem:[#allocation1] sm:%s3] %v32
    %s34 = scalar_lea.vmem [#allocation1], 8
    %s35 = smov 3
    %v36 = vld [vmem:[%s34] ss:$16 sm:%s35]
    %s37 = scalar_lea.vmem [#allocation1], 8
    %s38 = smov 12
    %v39 = vld [vmem:[%s37] ss:$16 sm:%s38]
    %vm40 = vcmask 1043458
    %v41 = vsel %vm40, %v39, %v36
    %vm42 = vcmask 1039360
    %s43 = scalar_lea.vmem [#allocation0], 8
    %44 = vst.msk [vmem:[%s43] sm:$0xf] %vm42, %v41
    %s45 = smov 3
    %v46 = vld [vmem:[#allocation1] ss:$16 sm:%s45]
    %s47 = smov 12
    %v48 = vld [vmem:[#allocation1] ss:$16 sm:%s47]
    %vm49 = vcmask 1043458
    %v50 = vsel %vm49, %v48, %v46
    %51 = vst [vmem:[#allocation0] sm:$0xf] %v50
    %s52 = scalar_lea.vmem [#allocation1], 9
    %s53 = smov 3
    %v54 = vld [vmem:[%s52] ss:$16 sm:%s53]
    %s55 = scalar_lea.vmem [#allocation1], 9
    %s56 = smov 12
    %v57 = vld [vmem:[%s55] ss:$16 sm:%s56]
    %vm58 = vcmask 1043458
    %v59 = vsel %vm58, %v57, %v54
    %s60 = scalar_lea.vmem [#allocation1], 1
    %s61 = smov 3
    %v62 = vld [vmem:[%s60] ss:$16 sm:%s61]
    %s63 = scalar_lea.vmem [#allocation1], 1
    %s64 = smov 12
    %v65 = vld [vmem:[%s63] ss:$16 sm:%s64]
    %vm66 = vcmask 1043458
    %v67 = vsel %vm66, %v65, %v62
    %s68 = scalar_lea.vmem [#allocation1], 4294967241
    %s69 = smov 48
    %v70 = vld [vmem:[%s68] ss:$16 sm:%s69]
    %vm71 = vcmask 1045508
    %v72 = vsel %vm71, %v70, %v67
    %s73 = scalar_lea.vmem [#allocation1], 4294967241
    %s74 = smov 192
    %v75 = vld [vmem:[%s73] ss:$16 sm:%s74]
    %vm76 = vcmask 1047558
    %v77 = vsel %vm76, %v75, %v72
    %vm78 = vcmask 7168
    %v79 = vsel %vm78, %v77, %v59
    %80 = vrot.lane.b32.xlu0 %v79, 127
    %v81 = vpop.permute.xlu0 %80
    %vm82 = vcmask 1031168
    %s83 = scalar_lea.vmem [#allocation0], 24
    %84 = vst.msk [vmem:[%s83] sm:$0xf] %vm82, %v81
    %vm85 = vcmask 1048568
    %s86 = scalar_lea.vmem [#allocation0], 8
    %87 = vst.msk [vmem:[%s86] sm:$0xf] %vm85, %v81
    %s88 = scalar_lea.vmem [#allocation0], 12
    %89 = vst.msk [vmem:[%s88] sm:$0xf0] %vm85, %v81
    %s90 = scalar_lea.vmem [#allocation1], 1
    %s91 = smov 3
    %v92 = vld [vmem:[%s90] ss:$16 sm:%s91]
    %s93 = scalar_lea.vmem [#allocation1], 1
    %s94 = smov 12
    %v95 = vld [vmem:[%s93] ss:$16 sm:%s94]
    %vm96 = vcmask 1043458
    %v97 = vsel %vm96, %v95, %v92
    %98 = vrot.lane.b32.xlu0 %v97, 127
    %v99 = vpop.permute.xlu0 %98
    %vm100 = vcmask 1039360
    %s101 = scalar_lea.vmem [#allocation0], 16
    %102 = vst.msk [vmem:[%s101] sm:$0xf] %vm100, %v99
    %s104 = ssub.s32 16, 1
    %v105 = vld [vmem:[#allocation0] sm:%s104]
    %s107 = ssub.s32 16, 1
    %108 = vst [vmem:[%s1] sm:%s107] %v105
    %s109 = scalar_lea.vmem [#allocation0], 8
    %v110 = vld [vmem:[%s109] sm:%s104]
    %s112 = ssub.s32 16, 1
    %s113 = scalar_lea.vmem %s1, 4
    %114 = vst [vmem:[%s113] sm:%s112] %v110
    %s115 = scalar_lea.vmem [#allocation0], 16
    %v116 = vld [vmem:[%s115] sm:%s104]
    %s118 = ssub.s32 16, 1
    %s119 = scalar_lea.vmem %s1, 8
    %120 = vst [vmem:[%s119] sm:%s118] %v116
    %s121 = scalar_lea.vmem [#allocation0], 24
    %v122 = vld [vmem:[%s121] sm:%s104]
    %s124 = ssub.s32 16, 1
    %s125 = scalar_lea.vmem %s1, 12
    %126 = vst [vmem:[%s125] sm:%s124] %v122

// kernel: ssd_model.19
$region0: #{ssd_model.19}
  #allocation0 [shape = 'u32[]', space=smem, size = 0x4, offset = 0x4, fixed_abs, tag = 'smem constant byte address 0x4 - core index']
  #allocation1 [shape = 'u32[72,128]{1,0:T(1,128)}', space=vmem, size = 0x9000, scoped, tag = 'internal scratch']
  %s0 = inlined_call_operand.vmem [shape: bf16[128,16], index: 0, kind: input, shape index: {}]
  %s1 = inlined_call_operand.vmem [shape: bf16[16,24], index: 1, kind: input, shape index: {}]
  %s2 = inlined_call_operand.vmem [shape: f32[1,24], index: 2, kind: input, shape index: {}]
  %s3 = inlined_call_operand.vmem [shape: f32[128,24], index: 3, kind: output, shape index: {}]
  %s4 = sld [smem:[#allocation0]]
  $region22: #{ssd_model.19} parent=0
    _
  %s6 = ssub.s32 1, %s4
  %s7 = scalar_select 0, %s6, %s4
  // Predicated region
  $region2: #{ssd_model.19} parent=0 // pred_check
    _
  $region3: #{ssd_model.19} parent=0 // pred_check_branch
    %9 = sbr.rel (0) target = $region5
  $region4: #{ssd_model.19} parent=0 // pred_region
    _
  $region5: #{ssd_model.19} parent=0 // pred_fallthru
    _
  // Predicated region
  $region6: #{ssd_model.19} parent=0 // pred_check
    _
  $region7: #{ssd_model.19} parent=0 // pred_check_branch
    %11 = sbr.rel (0) target = $region9
  $region8: #{ssd_model.19} parent=0 // pred_region
    _
  $region9: #{ssd_model.19} parent=0 // pred_fallthru
    _
  // Predicated region
  $region10: #{ssd_model.19} parent=0 // pred_check
    _
  $region11: #{ssd_model.19} parent=0 // pred_check_branch
    %13 = sbr.rel (0) target = $region13
  $region12: #{ssd_model.19} parent=0 // pred_region
    _
  $region13: #{ssd_model.19} parent=0 // pred_fallthru
    _
  %v15 = vld [vmem:[%s0] sm:$0xf]
  %v16 = vld [vmem:[%s0 + $0x4] sm:$0xf]
  %v17 = vld [vmem:[%s0 + $0x8] sm:$0xf]
  %v18 = vld [vmem:[%s0 + $0xc] sm:$0xf]
  %v19 = vld [vmem:[%s0 + $0x10] sm:$0xf]
  %v20 = vld [vmem:[%s0 + $0x14] sm:$0xf]
  %v21 = vld [vmem:[%s0 + $0x18] sm:$0xf]
  %v22 = vld [vmem:[%s0 + $0x1c] sm:$0xf]
  %v23 = vld [vmem:[%s0 + $0x20] sm:$0xf]
  %v24 = vld [vmem:[%s0 + $0x24] sm:$0xf]
  %v25 = vld [vmem:[%s0 + $0x28] sm:$0xf]
  %v26 = vld [vmem:[%s0 + $0x2c] sm:$0xf]
  %v27 = vld [vmem:[%s0 + $0x30] sm:$0xf]
  %v28 = vld [vmem:[%s0 + $0x34] sm:$0xf]
  %v29 = vld [vmem:[%s0 + $0x38] sm:$0xf]
  %v30 = vld [vmem:[%s0 + $0x3c] sm:$0xf]
  %v31 = vld [vmem:[%s1] sm:$0xf]
  %v32 = vld [vmem:[%s1 + $0x4] sm:$0xf]
  %v33 = vld [vmem:[%s2] sm:$0x1]
  %v35 = vperm.slane %v33, 0
  %v53 = vunpack.c.l.b16 %v15
  %v54 = vunpack.c.l.b16 %v16
  %v55 = vunpack.c.l.b16 %v17
  %v56 = vunpack.c.l.b16 %v18
  %v57 = vunpack.c.l.b16 %v19
  %v58 = vunpack.c.l.b16 %v20
  %v59 = vunpack.c.l.b16 %v21
  %v60 = vunpack.c.l.b16 %v22
  %v61 = vunpack.c.l.b16 %v23
  %v62 = vunpack.c.l.b16 %v24
  %v63 = vunpack.c.l.b16 %v25
  %v64 = vunpack.c.l.b16 %v26
  %v65 = vunpack.c.l.b16 %v27
  %v66 = vunpack.c.l.b16 %v28
  %v67 = vunpack.c.l.b16 %v29
  %v68 = vunpack.c.l.b16 %v30
  %v69 = vpack.c.b16 %v54, %v53
  %v70 = vpack.c.b16 %v56, %v55
  %v71 = vpack.c.b16 %v58, %v57
  %v72 = vpack.c.b16 %v60, %v59
  %v73 = vpack.c.b16 %v62, %v61
  %v74 = vpack.c.b16 %v64, %v63
  %v75 = vpack.c.b16 %v66, %v65
  %v76 = vpack.c.b16 %v68, %v67
  %v79 = vunpack.c.l.b16 %v31
  %v80 = vunpack.c.l.b16 %v32
  %v81 = vpack.c.b16 %v80, %v79
  %vm83 = vcmask 130048
  %v85 = vsel %vm83, %v69, 0
  %v88 = vsel %vm83, %v70, 0
  %v91 = vsel %vm83, %v71, 0
  %v94 = vsel %vm83, %v72, 0
  %v97 = vsel %vm83, %v73, 0
  %v100 = vsel %vm83, %v74, 0
  %v103 = vsel %vm83, %v75, 0
  %v106 = vsel %vm83, %v76, 0
  %108 = vmatpush.bf16.msra.mxu0 0
  %109 = vmatpush.bf16.msra.mxu0 0
  %110 = vmatpush.bf16.msra.mxu0 0
  %111 = vmatpush.bf16.msra.mxu0 0
  %112 = vmatpush.bf16.msra.mxu0 0
  %113 = vmatpush.bf16.msra.mxu0 0
  %114 = vmatpush.bf16.msra.mxu0 0
  %115 = vmatpush.bf16.msra.mxu0 %v81
  %116 = vmatmul.bf16.gmra.mxu0 %v85
  %v117 = vpop.f32.mrf.mxu0
  %v118 = vadd.f32 %v35, %v117
  %v119 = vpop.f32.mrf.mxu0
  %v120 = vadd.f32 %v35, %v119
  %121 = vmatmul.bf16.gmra.mxu0 %v88
  %v122 = vpop.f32.mrf.mxu0
  %v123 = vadd.f32 %v35, %v122
  %v124 = vpop.f32.mrf.mxu0
  %v125 = vadd.f32 %v35, %v124
  %126 = vmatmul.bf16.gmra.mxu0 %v91
  %v127 = vpop.f32.mrf.mxu0
  %v128 = vadd.f32 %v35, %v127
  %v129 = vpop.f32.mrf.mxu0
  %v130 = vadd.f32 %v35, %v129
  %131 = vmatmul.bf16.gmra.mxu0 %v94
  %v132 = vpop.f32.mrf.mxu0
  %v133 = vadd.f32 %v35, %v132
  %v134 = vpop.f32.mrf.mxu0
  %v135 = vadd.f32 %v35, %v134
  %136 = vmatmul.bf16.gmra.mxu0 %v97
  %v137 = vpop.f32.mrf.mxu0
  %v138 = vadd.f32 %v35, %v137
  %v139 = vpop.f32.mrf.mxu0
  %v140 = vadd.f32 %v35, %v139
  %141 = vmatmul.bf16.gmra.mxu0 %v100
  %v142 = vpop.f32.mrf.mxu0
  %v143 = vadd.f32 %v35, %v142
  %v144 = vpop.f32.mrf.mxu0
  %v145 = vadd.f32 %v35, %v144
  %146 = vmatmul.bf16.gmra.mxu0 %v103
  %v147 = vpop.f32.mrf.mxu0
  %v148 = vadd.f32 %v35, %v147
  %v149 = vpop.f32.mrf.mxu0
  %v150 = vadd.f32 %v35, %v149
  %151 = vmatmul.bf16.gmra.mxu0 %v106
  %v152 = vpop.f32.mrf.mxu0
  %v153 = vadd.f32 %v35, %v152
  %v154 = vpop.f32.mrf.mxu0
  %v155 = vadd.f32 %v35, %v154
  %156 = vdwg.mxu0
  %v157 = vlaneseq
  %v158 = vand.u32 %v157, 127
  %vm159 = vcmp.lt.s32.totalorder %v158, 12
  %v160 = vxor.u32 %v118, 2147483648
  %v161 = vxor.u32 %v120, 2147483648
  %v162 = vxor.u32 %v123, 2147483648
  %v163 = vxor.u32 %v125, 2147483648
  %v164 = vxor.u32 %v128, 2147483648
  %v165 = vxor.u32 %v130, 2147483648
  %v166 = vxor.u32 %v133, 2147483648
  %v167 = vxor.u32 %v135, 2147483648
  %v168 = vxor.u32 %v138, 2147483648
  %v169 = vxor.u32 %v140, 2147483648
  %v170 = vxor.u32 %v143, 2147483648
  %v171 = vxor.u32 %v145, 2147483648
  %v172 = vxor.u32 %v148, 2147483648
  %v173 = vxor.u32 %v150, 2147483648
  %v174 = vxor.u32 %v153, 2147483648
  %v175 = vxor.u32 %v155, 2147483648
  %v176 = vmul.f32 %v160, 1.442695
  %v177 = vpow.pop %v176
  %v178 = vmul.f32 %v161, 1.442695
  %v179 = vpow.pop %v178
  %v180 = vmul.f32 %v162, 1.442695
  %v181 = vpow.pop %v180
  %v182 = vmul.f32 %v163, 1.442695
  %v183 = vpow.pop %v182
  %v184 = vmul.f32 %v164, 1.442695
  %v185 = vpow.pop %v184
  %v186 = vmul.f32 %v165, 1.442695
  %v187 = vpow.pop %v186
  %v188 = vmul.f32 %v166, 1.442695
  %v189 = vpow.pop %v188
  %v190 = vmul.f32 %v167, 1.442695
  %v191 = vpow.pop %v190
  %v192 = vmul.f32 %v168, 1.442695
  %v193 = vpow.pop %v192
  %v194 = vmul.f32 %v169, 1.442695
  %v195 = vpow.pop %v194
  %v196 = vmul.f32 %v170, 1.442695
  %v197 = vpow.pop %v196
  %v198 = vmul.f32 %v171, 1.442695
  %v199 = vpow.pop %v198
  %v200 = vmul.f32 %v172, 1.442695
  %v201 = vpow.pop %v200
  %v202 = vmul.f32 %v173, 1.442695
  %v203 = vpow.pop %v202
  %v204 = vmul.f32 %v174, 1.442695
  %v205 = vpow.pop %v204
  %v206 = vmul.f32 %v175, 1.442695
  %v207 = vpow.pop %v206
  %v208 = vadd.f32 %v177, 1.0
  %v209 = vadd.f32 %v179, 1.0
  %v210 = vadd.f32 %v181, 1.0
  %v211 = vadd.f32 %v183, 1.0
  %v212 = vadd.f32 %v185, 1.0
  %v213 = vadd.f32 %v187, 1.0
  %v214 = vadd.f32 %v189, 1.0
  %v215 = vadd.f32 %v191, 1.0
  %v216 = vadd.f32 %v193, 1.0
  %v217 = vadd.f32 %v195, 1.0
  %v218 = vadd.f32 %v197, 1.0
  %v219 = vadd.f32 %v199, 1.0
  %v220 = vadd.f32 %v201, 1.0
  %v221 = vadd.f32 %v203, 1.0
  %v222 = vadd.f32 %v205, 1.0
  %v223 = vadd.f32 %v207, 1.0
  %v224 = vrcp.pop %v208
  %v225 = vmul.f32 %v208, %v224
  %v226 = vsub.f32 1.0, %v225
  %v227 = vmul.f32 %v224, %v226
  %v228 = vadd.f32 %v224, %v227
  %vm229 = vweird.f32 %v208
  %vm230 = vweird.f32 %v224
  %vm231 = vmor %vm229, %vm230
  %v232 = vsel %vm231, %v224, %v228
  %v233 = vand.u32 2147483647, %v208
  %vm234 = vcmp.eq.f32.partialorder %v233, 8.507059e+37
  %v235 = vand.u32 %v208, 2147483648
  %v236 = vor.u32 1.1754944e-38, %v235
  %v237 = vsel %vm234, %v236, %v232
  %v238 = vmul.f32 1.0, %v237
  %v239 = vrcp.pop %v209
  %v240 = vmul.f32 %v209, %v239
  %v241 = vsub.f32 1.0, %v240
  %v242 = vmul.f32 %v239, %v241
  %v243 = vadd.f32 %v239, %v242
  %vm244 = vweird.f32 %v209
  %vm245 = vweird.f32 %v239
  %vm246 = vmor %vm244, %vm245
  %v247 = vsel %vm246, %v239, %v243
  %v248 = vand.u32 2147483647, %v209
  %vm249 = vcmp.eq.f32.partialorder %v248, 8.507059e+37
  %v250 = vand.u32 %v209, 2147483648
  %v251 = vor.u32 1.1754944e-38, %v250
  %v252 = vsel %vm249, %v251, %v247
  %v253 = vmul.f32 1.0, %v252
  %v254 = vrcp.pop %v210
  %v255 = vmul.f32 %v210, %v254
  %v256 = vsub.f32 1.0, %v255
  %v257 = vmul.f32 %v254, %v256
  %v258 = vadd.f32 %v254, %v257
  %vm259 = vweird.f32 %v210
  %vm260 = vweird.f32 %v254
  %vm261 = vmor %vm259, %vm260
  %v262 = vsel %vm261, %v254, %v258
  %v263 = vand.u32 2147483647, %v210
  %vm264 = vcmp.eq.f32.partialorder %v263, 8.507059e+37
  %v265 = vand.u32 %v210, 2147483648
  %v266 = vor.u32 1.1754944e-38, %v265
  %v267 = vsel %vm264, %v266, %v262
  %v268 = vmul.f32 1.0, %v267
  %v269 = vrcp.pop %v211
  %v270 = vmul.f32 %v211, %v269
  %v271 = vsub.f32 1.0, %v270
  %v272 = vmul.f32 %v269, %v271
  %v273 = vadd.f32 %v269, %v272
  %vm274 = vweird.f32 %v211
  %vm275 = vweird.f32 %v269
  %vm276 = vmor %vm274, %vm275
  %v277 = vsel %vm276, %v269, %v273
  %v278 = vand.u32 2147483647, %v211
  %vm279 = vcmp.eq.f32.partialorder %v278, 8.507059e+37
  %v280 = vand.u32 %v211, 2147483648
  %v281 = vor.u32 1.1754944e-38, %v280
  %v282 = vsel %vm279, %v281, %v277
  %v283 = vmul.f32 1.0, %v282
  %v284 = vrcp.pop %v212
  %v285 = vmul.f32 %v212, %v284
  %v286 = vsub.f32 1.0, %v285
  %v287 = vmul.f32 %v284, %v286
  %v288 = vadd.f32 %v284, %v287
  %vm289 = vweird.f32 %v212
  %vm290 = vweird.f32 %v284
  %vm291 = vmor %vm289, %vm290
  %v292 = vsel %vm291, %v284, %v288
  %v293 = vand.u32 2147483647, %v212
  %vm294 = vcmp.eq.f32.partialorder %v293, 8.507059e+37
  %v295 = vand.u32 %v212, 2147483648
  %v296 = vor.u32 1.1754944e-38, %v295
  %v297 = vsel %vm294, %v296, %v292
  %v298 = vmul.f32 1.0, %v297
  %v299 = vrcp.pop %v213
  %v300 = vmul.f32 %v213, %v299
  %v301 = vsub.f32 1.0, %v300
  %v302 = vmul.f32 %v299, %v301
  %v303 = vadd.f32 %v299, %v302
  %vm304 = vweird.f32 %v213
  %vm305 = vweird.f32 %v299
  %vm306 = vmor %vm304, %vm305
  %v307 = vsel %vm306, %v299, %v303
  %v308 = vand.u32 2147483647, %v213
  %vm309 = vcmp.eq.f32.partialorder %v308, 8.507059e+37
  %v310 = vand.u32 %v213, 2147483648
  %v311 = vor.u32 1.1754944e-38, %v310
  %v312 = vsel %vm309, %v311, %v307
  %v313 = vmul.f32 1.0, %v312
  %v314 = vrcp.pop %v214
  %v315 = vmul.f32 %v214, %v314
  %v316 = vsub.f32 1.0, %v315
  %v317 = vmul.f32 %v314, %v316
  %v318 = vadd.f32 %v314, %v317
  %vm319 = vweird.f32 %v214
  %vm320 = vweird.f32 %v314
  %vm321 = vmor %vm319, %vm320
  %v322 = vsel %vm321, %v314, %v318
  %v323 = vand.u32 2147483647, %v214
  %vm324 = vcmp.eq.f32.partialorder %v323, 8.507059e+37
  %v325 = vand.u32 %v214, 2147483648
  %v326 = vor.u32 1.1754944e-38, %v325
  %v327 = vsel %vm324, %v326, %v322
  %v328 = vmul.f32 1.0, %v327
  %v329 = vrcp.pop %v215
  %v330 = vmul.f32 %v215, %v329
  %v331 = vsub.f32 1.0, %v330
  %v332 = vmul.f32 %v329, %v331
  %v333 = vadd.f32 %v329, %v332
  %vm334 = vweird.f32 %v215
  %vm335 = vweird.f32 %v329
  %vm336 = vmor %vm334, %vm335
  %v337 = vsel %vm336, %v329, %v333
  %v338 = vand.u32 2147483647, %v215
  %vm339 = vcmp.eq.f32.partialorder %v338, 8.507059e+37
  %v340 = vand.u32 %v215, 2147483648
  %v341 = vor.u32 1.1754944e-38, %v340
  %v342 = vsel %vm339, %v341, %v337
  %v343 = vmul.f32 1.0, %v342
  %v344 = vrcp.pop %v216
  %v345 = vmul.f32 %v216, %v344
  %v346 = vsub.f32 1.0, %v345
  %v347 = vmul.f32 %v344, %v346
  %v348 = vadd.f32 %v344, %v347
  %vm349 = vweird.f32 %v216
  %vm350 = vweird.f32 %v344
  %vm351 = vmor %vm349, %vm350
  %v352 = vsel %vm351, %v344, %v348
  %v353 = vand.u32 2147483647, %v216
  %vm354 = vcmp.eq.f32.partialorder %v353, 8.507059e+37
  %v355 = vand.u32 %v216, 2147483648
  %v356 = vor.u32 1.1754944e-38, %v355
  %v357 = vsel %vm354, %v356, %v352
  %v358 = vmul.f32 1.0, %v357
  %v359 = vrcp.pop %v217
  %v360 = vmul.f32 %v217, %v359
  %v361 = vsub.f32 1.0, %v360
  %v362 = vmul.f32 %v359, %v361
  %v363 = vadd.f32 %v359, %v362
  %vm364 = vweird.f32 %v217
  %vm365 = vweird.f32 %v359
  %vm366 = vmor %vm364, %vm365
  %v367 = vsel %vm366, %v359, %v363
  %v368 = vand.u32 2147483647, %v217
  %vm369 = vcmp.eq.f32.partialorder %v368, 8.507059e+37
  %v370 = vand.u32 %v217, 2147483648
  %v371 = vor.u32 1.1754944e-38, %v370
  %v372 = vsel %vm369, %v371, %v367
  %v373 = vmul.f32 1.0, %v372
  %v374 = vrcp.pop %v218
  %v375 = vmul.f32 %v218, %v374
  %v376 = vsub.f32 1.0, %v375
  %v377 = vmul.f32 %v374, %v376
  %v378 = vadd.f32 %v374, %v377
  %vm379 = vweird.f32 %v218
  %vm380 = vweird.f32 %v374
  %vm381 = vmor %vm379, %vm380
  %v382 = vsel %vm381, %v374, %v378
  %v383 = vand.u32 2147483647, %v218
  %vm384 = vcmp.eq.f32.partialorder %v383, 8.507059e+37
  %v385 = vand.u32 %v218, 2147483648
  %v386 = vor.u32 1.1754944e-38, %v385
  %v387 = vsel %vm384, %v386, %v382
  %v388 = vmul.f32 1.0, %v387
  %v389 = vrcp.pop %v219
  %v390 = vmul.f32 %v219, %v389
  %v391 = vsub.f32 1.0, %v390
  %v392 = vmul.f32 %v389, %v391
  %v393 = vadd.f32 %v389, %v392
  %vm394 = vweird.f32 %v219
  %vm395 = vweird.f32 %v389
  %vm396 = vmor %vm394, %vm395
  %v397 = vsel %vm396, %v389, %v393
  %v398 = vand.u32 2147483647, %v219
  %vm399 = vcmp.eq.f32.partialorder %v398, 8.507059e+37
  %v400 = vand.u32 %v219, 2147483648
  %v401 = vor.u32 1.1754944e-38, %v400
  %v402 = vsel %vm399, %v401, %v397
  %v403 = vmul.f32 1.0, %v402
  %v404 = vrcp.pop %v220
  %v405 = vmul.f32 %v220, %v404
  %v406 = vsub.f32 1.0, %v405
  %v407 = vmul.f32 %v404, %v406
  %v408 = vadd.f32 %v404, %v407
  %vm409 = vweird.f32 %v220
  %vm410 = vweird.f32 %v404
  %vm411 = vmor %vm409, %vm410
  %v412 = vsel %vm411, %v404, %v408
  %v413 = vand.u32 2147483647, %v220
  %vm414 = vcmp.eq.f32.partialorder %v413, 8.507059e+37
  %v415 = vand.u32 %v220, 2147483648
  %v416 = vor.u32 1.1754944e-38, %v415
  %v417 = vsel %vm414, %v416, %v412
  %v418 = vmul.f32 1.0, %v417
  %v419 = vrcp.pop %v221
  %v420 = vmul.f32 %v221, %v419
  %v421 = vsub.f32 1.0, %v420
  %v422 = vmul.f32 %v419, %v421
  %v423 = vadd.f32 %v419, %v422
  %vm424 = vweird.f32 %v221
  %vm425 = vweird.f32 %v419
  %vm426 = vmor %vm424, %vm425
  %v427 = vsel %vm426, %v419, %v423
  %v428 = vand.u32 2147483647, %v221
  %vm429 = vcmp.eq.f32.partialorder %v428, 8.507059e+37
  %v430 = vand.u32 %v221, 2147483648
  %v431 = vor.u32 1.1754944e-38, %v430
  %v432 = vsel %vm429, %v431, %v427
  %v433 = vmul.f32 1.0, %v432
  %v434 = vrcp.pop %v222
  %v435 = vmul.f32 %v222, %v434
  %v436 = vsub.f32 1.0, %v435
  %v437 = vmul.f32 %v434, %v436
  %v438 = vadd.f32 %v434, %v437
  %vm439 = vweird.f32 %v222
  %vm440 = vweird.f32 %v434
  %vm441 = vmor %vm439, %vm440
  %v442 = vsel %vm441, %v434, %v438
  %v443 = vand.u32 2147483647, %v222
  %vm444 = vcmp.eq.f32.partialorder %v443, 8.507059e+37
  %v445 = vand.u32 %v222, 2147483648
  %v446 = vor.u32 1.1754944e-38, %v445
  %v447 = vsel %vm444, %v446, %v442
  %v448 = vmul.f32 1.0, %v447
  %v449 = vrcp.pop %v223
  %v450 = vmul.f32 %v223, %v449
  %v451 = vsub.f32 1.0, %v450
  %v452 = vmul.f32 %v449, %v451
  %v453 = vadd.f32 %v449, %v452
  %vm454 = vweird.f32 %v223
  %vm455 = vweird.f32 %v449
  %vm456 = vmor %vm454, %vm455
  %v457 = vsel %vm456, %v449, %v453
  %v458 = vand.u32 2147483647, %v223
  %vm459 = vcmp.eq.f32.partialorder %v458, 8.507059e+37
  %v460 = vand.u32 %v223, 2147483648
  %v461 = vor.u32 1.1754944e-38, %v460
  %v462 = vsel %vm459, %v461, %v457
  %v463 = vmul.f32 1.0, %v462
  %v464 = vsel %vm159, %v238, %v118
  %v465 = vsel %vm159, %v253, %v120
  %v466 = vsel %vm159, %v268, %v123
  %v467 = vsel %vm159, %v283, %v125
  %v468 = vsel %vm159, %v298, %v128
  %v469 = vsel %vm159, %v313, %v130
  %v470 = vsel %vm159, %v328, %v133
  %v471 = vsel %vm159, %v343, %v135
  %v472 = vsel %vm159, %v358, %v138
  %v473 = vsel %vm159, %v373, %v140
  %v474 = vsel %vm159, %v388, %v143
  %v475 = vsel %vm159, %v403, %v145
  %v476 = vsel %vm159, %v418, %v148
  %v477 = vsel %vm159, %v433, %v150
  %v478 = vsel %vm159, %v448, %v153
  %v479 = vsel %vm159, %v463, %v155
  %vm480 = vcmask 195584
  %481 = vst.msk [vmem:[%s3] sm:$0xff] %vm480, %v464
  %482 = vst.msk [vmem:[%s3 + $0x8] sm:$0xff] %vm480, %v465
  %483 = vst.msk [vmem:[%s3 + $0x10] sm:$0xff] %vm480, %v466
  %484 = vst.msk [vmem:[%s3 + $0x18] sm:$0xff] %vm480, %v467
  %485 = vst.msk [vmem:[%s3 + $0x20] sm:$0xff] %vm480, %v468
  %486 = vst.msk [vmem:[%s3 + $0x28] sm:$0xff] %vm480, %v469
  %487 = vst.msk [vmem:[%s3 + $0x30] sm:$0xff] %vm480, %v470
  %488 = vst.msk [vmem:[%s3 + $0x38] sm:$0xff] %vm480, %v471
  %489 = vst.msk [vmem:[%s3 + $0x40] sm:$0xff] %vm480, %v472
  %490 = vst.msk [vmem:[%s3 + $0x48] sm:$0xff] %vm480, %v473
  %491 = vst.msk [vmem:[%s3 + $0x50] sm:$0xff] %vm480, %v474
  %492 = vst.msk [vmem:[%s3 + $0x58] sm:$0xff] %vm480, %v475
  %493 = vst.msk [vmem:[%s3 + $0x60] sm:$0xff] %vm480, %v476
  %494 = vst.msk [vmem:[%s3 + $0x68] sm:$0xff] %vm480, %v477
  %495 = vst.msk [vmem:[%s3 + $0x70] sm:$0xff] %vm480, %v478
  %496 = vst.msk [vmem:[%s3 + $0x78] sm:$0xff] %vm480, %v479
  // Predicated region
  $region14: #{ssd_model.19} parent=0 // pred_check
    _
  $region15: #{ssd_model.19} parent=0 // pred_check_branch
    %498 = sbr.rel (0) target = $region17
  $region16: #{ssd_model.19} parent=0 // pred_region
    _
  $region17: #{ssd_model.19} parent=0 // pred_fallthru
    _
  // Predicated region
  $region18: #{ssd_model.19} parent=0 // pred_check
    _
  $region19: #{ssd_model.19} parent=0 // pred_check_branch
    %500 = sbr.rel (0) target = $region21
  $region20: #{ssd_model.19} parent=0 // pred_region
    _
  $region21: #{ssd_model.19} parent=0 // pred_fallthru
    _

// kernel: ssd_model.23
$region0: #{ssd_model.23}
  #allocation0 [shape = 'u32[]', space=smem, size = 0x4, offset = 0x4, fixed_abs, tag = 'smem constant byte address 0x4 - core index']
  #allocation1 [shape = 'u32[72,128]{1,0:T(1,128)}', space=vmem, size = 0x9000, scoped, tag = 'internal scratch']
  %s0 = inlined_call_operand.vmem [shape: f32[4,510], index: 0, kind: input, shape index: {}]
  %s1 = inlined_call_operand.vmem [shape: f32[4,510], index: 1, kind: input, shape index: {}]
  %s2 = inlined_call_operand.vmem [shape: f32[4,510], index: 2, kind: output, shape index: {}]
  %s3 = sld [smem:[#allocation0]]
  $region18: #{ssd_model.23} parent=0
    _
  %s5 = ssub.s32 1, %s3
  %s6 = scalar_select 0, %s5, %s3
  // Predicated region
  $region2: #{ssd_model.23} parent=0 // pred_check
    _
  $region3: #{ssd_model.23} parent=0 // pred_check_branch
    %8 = sbr.rel (0) target = $region5
  $region4: #{ssd_model.23} parent=0 // pred_region
    _
  $region5: #{ssd_model.23} parent=0 // pred_fallthru
    _
  // Predicated region
  $region6: #{ssd_model.23} parent=0 // pred_check
    _
  $region7: #{ssd_model.23} parent=0 // pred_check_branch
    %10 = sbr.rel (0) target = $region9
  $region8: #{ssd_model.23} parent=0 // pred_region
    _
  $region9: #{ssd_model.23} parent=0 // pred_fallthru
    _
  %v11 = vld [vmem:[%s0] ss:$4 sm:$0xf]
  %v12 = vmul.f32 %v11, 0.1
  %s13 = scalar_lea.vmem %s0, 1
  %v14 = vld [vmem:[%s13] ss:$4 sm:$0xf]
  %v15 = vmul.f32 %v14, 0.1
  %s16 = scalar_lea.vmem %s0, 2
  %v17 = vld [vmem:[%s16] ss:$4 sm:$0xf]
  %v18 = vmul.f32 %v17, 0.2
  %s19 = scalar_lea.vmem %s0, 3
  %v20 = vld [vmem:[%s19] ss:$4 sm:$0xf]
  %v21 = vmul.f32 %v20, 0.2
  %v22 = vld [vmem:[%s1] ss:$4 sm:$0xf]
  %s23 = scalar_lea.vmem %s1, 1
  %v24 = vld [vmem:[%s23] ss:$4 sm:$0xf]
  %s25 = scalar_lea.vmem %s1, 2
  %v26 = vld [vmem:[%s25] ss:$4 sm:$0xf]
  %s27 = scalar_lea.vmem %s1, 3
  %v28 = vld [vmem:[%s27] ss:$4 sm:$0xf]
  %v29 = vmul.f32 %v18, 1.442695
  %v30 = vpow.pop %v29
  %v31 = vmul.f32 %v30, %v26
  %v32 = vmul.f32 %v31, 0.5
  %v33 = vmul.f32 %v21, 1.442695
  %v34 = vpow.pop %v33
  %v35 = vmul.f32 %v34, %v28
  %v36 = vmul.f32 %v35, 0.5
  %v37 = vmul.f32 %v12, %v26
  %v38 = vadd.f32 %v37, %v22
  %v39 = vmul.f32 %v15, %v28
  %v40 = vadd.f32 %v39, %v24
  %v41 = vsub.f32 %v38, %v32
  %v42 = vsub.f32 %v40, %v36
  %v43 = vadd.f32 %v38, %v32
  %v44 = vadd.f32 %v40, %v36
  %v46 = vperm.slane %v41, 0
  %v47 = vperm.slane %v41, 1
  %v48 = vperm.slane %v41, 2
  %v49 = vperm.slane %v41, 3
  %v55 = vperm.slane %v42, 0
  %v56 = vperm.slane %v42, 1
  %v57 = vperm.slane %v42, 2
  %v58 = vperm.slane %v42, 3
  %v64 = vperm.slane %v43, 0
  %v65 = vperm.slane %v43, 1
  %v66 = vperm.slane %v43, 2
  %v67 = vperm.slane %v43, 3
  %v73 = vperm.slane %v44, 0
  %v74 = vperm.slane %v44, 1
  %v75 = vperm.slane %v44, 2
  %v76 = vperm.slane %v44, 3
  %vm81 = vcmask 1040384
  %v82 = vsel %vm81, %v46, %v55
  %v83 = vsel %vm81, %v47, %v56
  %v84 = vsel %vm81, %v48, %v57
  %v85 = vsel %vm81, %v49, %v58
  %vm86 = vcmask 1041408
  %v87 = vsel %vm86, %v82, %v64
  %v88 = vsel %vm86, %v83, %v65
  %v89 = vsel %vm86, %v84, %v66
  %v90 = vsel %vm86, %v85, %v67
  %vm91 = vcmask 1042432
  %v92 = vsel %vm91, %v87, %v73
  %v93 = vsel %vm91, %v88, %v74
  %v94 = vsel %vm91, %v89, %v75
  %v95 = vsel %vm91, %v90, %v76
  %v100 = vrot.slane %v93, 4
  %v101 = vrot.slane %v95, 4
  %vm102 = vcmask 1043456
  %v103 = vsel %vm102, %v92, %v100
  %v104 = vsel %vm102, %v94, %v101
  %107 = vst [vmem:[%s2] sm:$0xff] %v103
  %vm108 = vcmask 1031172
  %vm109 = vmor %vm108, %vm102
  %110 = vst.msk [vmem:[%s2 + $0x8] sm:$0xff] %vm109, %v104
  // Predicated region
  $region10: #{ssd_model.23} parent=0 // pred_check
    _
  $region11: #{ssd_model.23} parent=0 // pred_check_branch
    %112 = sbr.rel (0) target = $region13
  $region12: #{ssd_model.23} parent=0 // pred_region
    _
  $region13: #{ssd_model.23} parent=0 // pred_fallthru
    _
  // Predicated region
  $region14: #{ssd_model.23} parent=0 // pred_check
    _
  $region15: #{ssd_model.23} parent=0 // pred_check_branch
    %114 = sbr.rel (0) target = $region17
  $region16: #{ssd_model.23} parent=0 // pred_region
    _
  $region17: #{ssd_model.23} parent=0 // pred_fallthru
    _

</llo_original>
